<compile_context>
chip_gen: v7x
topology: tpu7x:2x2x1
jax: 0.10.0
libtpu: 0.0.40
codegen_flags: <defaults>
</compile_context>

<pallas_src>
import functools

import jax
import jax.numpy as jnp
from jax.experimental import pallas as pl
from jax.experimental.pallas import tpu as pltpu

LANE = 128       # TPU vreg lane width
M_TARGET = 256   # target rows per pointwise matmul (amortizes per-step overhead)


def _round_up(x, m):
    return (x + m - 1) // m * m


def _sepconv_kernel(x_hbm, wd_ref, wp_ref, o_ref, xbuf, copy_sem, *,
                    TH, TH_in, W_out, K, stride, dilation, c_chunk, mxu_dtype):
    """One grid step = one image x one tile of TH output rows.

    x_hbm : (N, Hp, Wp, Cp)     padded NHWC input, raw HBM ref (manual DMA)
    wd_ref: (K, K, Cp)          depthwise filter (channel-padded, VMEM)
    wp_ref: (Cp, Coutp)         pointwise (1x1) weights (channel-padded, VMEM)
    o_ref : (TH, W_out, Coutp)  output row tile (VMEM)
    xbuf  : (2, TH_in, Wp, Cp)  double-buffered input row slab
    copy_sem: DMA semaphores, one per slot
    """
    n = pl.program_id(0)
    t = pl.program_id(1)
    num_t = pl.num_programs(1)
    Cp, Coutp = wp_ref.shape
    slot = t % 2

    def row_copy(t_idx, slot_idx):
        h0 = t_idx * (TH * stride)          # element offset of this tile's first input row
        return pltpu.make_async_copy(
            x_hbm.at[n, pl.ds(h0, TH_in)], xbuf.at[slot_idx], copy_sem.at[slot_idx])

    # Prime the pipeline at the first row-tile of each image (slot is 0 there).
    @pl.when(t == 0)
    def _():
        row_copy(0, 0).start()

    # Prefetch the next row-tile of the same image into the other slot; it is consumed
    # by the next grid step.  The t axis is "arbitrary" so steps over t run sequentially
    # on one core and the chain never crosses an image boundary.
    @pl.when(t + 1 < num_t)
    def _():
        row_copy(t + 1, 1 - slot).start()

    # Wait for this tile's input rows (started here if t==0, else by the previous step).
    row_copy(t, slot).wait()

    xt = xbuf.at[slot]                       # (TH_in, Wp, Cp) VMEM ref view
    M = TH * W_out
    out_acc = jnp.zeros((M, Coutp), jnp.float32)

    # Channel-chunked depthwise (VPU) + pointwise (MXU): keeps the live depthwise
    # accumulator small and lets the MXU matmul of chunk c overlap the VPU taps of
    # chunk c+1 (different VLIW slots).
    for c0 in range(0, Cp, c_chunk):
        acc_c = None
        for kh in range(K):
            for kw in range(K):
                if stride == 1:
                    h_idx = pl.ds(kh * dilation, TH)
                    w_idx = pl.ds(kw * dilation, W_out)
                else:
                    # TODO(synk): strided tap reads (stride>1) via pl.ds(..., stride);
                    # verify Mosaic lowering for exotic stride/dtype combos.
                    h_idx = pl.ds(kh * dilation, TH, stride)
                    w_idx = pl.ds(kw * dilation, W_out, stride)
                patch = xt[h_idx, w_idx, pl.ds(c0, c_chunk)]          # (TH, W_out, c_chunk)
                # TODO(synk): for bf16 inputs on v5e, pre-cast the chunk slab once
                # instead of per-tap (VPU has no bf16 ALU there).
                wtap = wd_ref[kh, kw, pl.ds(c0, c_chunk)].astype(jnp.float32)
                contrib = patch.astype(jnp.float32) * wtap
                acc_c = contrib if acc_c is None else acc_c + contrib
        lhs = acc_c.reshape(M, c_chunk).astype(mxu_dtype)             # layout no-op
        rhs = wp_ref[pl.ds(c0, c_chunk), :].astype(mxu_dtype)
        out_acc = out_acc + jnp.dot(lhs, rhs, preferred_element_type=jnp.float32)

    o_ref[...] = out_acc.reshape(TH, W_out, Coutp).astype(o_ref.dtype)


def separable_conv2d(x_nchw, w_depth, w_point, *, stride=1, padding=0, dilation=1,
                     use_bf16_mxu=None):
    """x_nchw: (N, Cin, H, W)   w_depth: (Cin, 1, K, K)   w_point: (Cout, Cin, 1, 1)"""
    N, Cin, H, W = x_nchw.shape
    K = w_depth.shape[-1]
    Cout = w_point.shape[0]
    H_out = (H + 2 * padding - dilation * (K - 1) - 1) // stride + 1
    W_out = (W + 2 * padding - dilation * (K - 1) - 1) // stride + 1

    # Lane-aligned channel counts (no-op pads when already multiples of 128).
    Cp = _round_up(Cin, LANE)
    Coutp = _round_up(Cout, LANE)

    # Row tile: target TH*W_out ~ M_TARGET matmul rows; no divisibility constraint on
    # H_out (input / output padded to a whole number of tiles, extra rows dropped).
    TH = max(1, min(H_out, -(-M_TARGET // W_out)))
    num_h_tiles = -(-H_out // TH)
    H_out_pad = num_h_tiles * TH
    TH_in = (TH - 1) * stride + (K - 1) * dilation + 1

    # NCHW -> NHWC; conv padding + row-tile padding + channel lane-padding in one pad.
    # TODO(synk): for stacked Xception layers keep activations NHWC end-to-end to avoid
    # these full-HBM transpose round-trips (and consider allow_input_fusion).
    Hp_need = (H_out_pad - 1) * stride + (K - 1) * dilation + 1
    Hp = max(H + 2 * padding, Hp_need)
    Wp = W + 2 * padding
    x = jnp.transpose(x_nchw, (0, 2, 3, 1))
    x = jnp.pad(x, ((0, 0), (padding, Hp - H - padding), (padding, padding),
                    (0, Cp - Cin)))

    wd = jnp.transpose(w_depth[:, 0, :, :], (1, 2, 0))               # (K, K, Cin)
    wd = jnp.pad(wd, ((0, 0), (0, 0), (0, Cp - Cin)))                # (K, K, Cp)
    wp = jnp.transpose(w_point[:, :, 0, 0], (1, 0))                  # (Cin, Cout)
    wp = jnp.pad(wp, ((0, Cp - Cin), (0, Coutp - Cout)))             # (Cp, Coutp)

    if use_bf16_mxu is None:
        use_bf16_mxu = (x_nchw.dtype == jnp.bfloat16)
    mxu_dtype = jnp.bfloat16 if use_bf16_mxu else jnp.float32
    c_chunk = 256 if Cp % 256 == 0 else 128

    kernel = functools.partial(
        _sepconv_kernel, TH=TH, TH_in=TH_in, W_out=W_out, K=K, stride=stride,
        dilation=dilation, c_chunk=c_chunk, mxu_dtype=mxu_dtype)

    # Generation-aware scoped-VMEM limit: ~85% of physical, capped at 100 MiB
    # (~54 MiB on v7x's 64 MiB, ~100 MiB on v5e/v6e's 128 MiB).
    try:
        vmem_cap = pltpu.get_tpu_info().vmem_capacity_bytes
    except Exception:
        vmem_cap = 64 * 1024 * 1024
    vmem_limit = min(int(vmem_cap * 0.85), 100 * 1024 * 1024)

    out_nhwc = pl.pallas_call(
        kernel,
        out_shape=jax.ShapeDtypeStruct((N, H_out_pad, W_out, Coutp), x_nchw.dtype),
        grid_spec=pltpu.PrefetchScalarGridSpec(
            num_scalar_prefetch=0,
            grid=(N, num_h_tiles),
            in_specs=[
                # Raw HBM ref: halo'd row tiles are DMA'd manually (double-buffered,
                # prefetched one step ahead), so VMEM holds only ~2*TH_in input rows.
                pl.BlockSpec(memory_space=pl.ANY),
                # TODO(synk): pipeline_mode=pl.Buffered(1) on the weight specs would
                # drop their unused second buffer (index maps are grid-constant).
                pl.BlockSpec((K, K, Cp), lambda n, t: (0, 0, 0)),
                pl.BlockSpec((Cp, Coutp), lambda n, t: (0, 0)),
            ],
            out_specs=pl.BlockSpec((None, TH, W_out, Coutp),
                                   lambda n, t: (n, t, 0, 0)),
            scratch_shapes=[
                pltpu.VMEM((2, TH_in, Wp, Cp), x.dtype),
                pltpu.SemaphoreType.DMA((2,)),
            ],
        ),
        compiler_params=pltpu.CompilerParams(
            # n is reduction-free -> shard across TensorCores (v7x).  t must stay
            # sequential ("arbitrary") because of the manual prefetch chain.
            dimension_semantics=("parallel", "arbitrary"),
            vmem_limit_bytes=vmem_limit,
        ),
    )(x, wd, wp)

    # Drop padded rows / output channels and return to NCHW.
    out_nhwc = out_nhwc[:, :H_out, :, :Cout]
    return jnp.transpose(out_nhwc, (0, 3, 1, 2))


def _reference(x_nchw, w_depth, w_point, *, stride, padding, dilation):
    """Pure-JAX reference via lax.conv_general_dilated (matches PyTorch F.conv2d)."""
    Cin = x_nchw.shape[1]
    y = jax.lax.conv_general_dilated(
        x_nchw, w_depth, window_strides=(stride, stride),
        padding=((padding, padding), (padding, padding)),
        rhs_dilation=(dilation, dilation),
        dimension_numbers=("NCHW", "OIHW", "NCHW"),
        feature_group_count=Cin)
    y = jax.lax.conv_general_dilated(
        y, w_point, window_strides=(1, 1), padding="VALID",
        dimension_numbers=("NCHW", "OIHW", "NCHW"))
    return y


if __name__ == "__main__":
    # Module config (typical Xception usage): kernel_size=3, stride=1, padding=1
    N, Cin, Cout, H, W = 2, 4, 8, 16, 16
    K, stride, padding, dilation = 3, 1, 1, 1

    key = jax.random.PRNGKey(0)
    kx, kd, kp = jax.random.split(key, 3)
    x = jax.random.normal(kx, (N, Cin, H, W), dtype=jnp.float32)
    # PyTorch parameter shapes:
    #   conv1.weight     : (Cin, 1, K, K)   (depthwise, groups=Cin, bias=False)
    #   pointwise.weight : (Cout, Cin, 1, 1)
    w_depth = jax.random.normal(kd, (Cin, 1, K, K), dtype=jnp.float32) * 0.1
    w_point = jax.random.normal(kp, (Cout, Cin, 1, 1), dtype=jnp.float32) * 0.1

    out = separable_conv2d(x, w_depth, w_point,
                           stride=stride, padding=padding, dilation=dilation)
    out = jax.block_until_ready(out)

    ref = _reference(x, w_depth, w_point,
                     stride=stride, padding=padding, dilation=dilation)
    assert out.shape == (N, Cout, H, W), out.shape
    assert jnp.allclose(out, ref, atol=1e-4, rtol=1e-4), "mismatch vs reference conv"

    print("KERNEL_OK")
</pallas_src>

<mosaic_0001>
module attributes {stable_mosaic.version = 11 : i64} {
  func.func @_sepconv_kernel(%arg0: i32, %arg1: i32, %arg2: memref<2x18x18x128xf32, #tpu.memory_space<any>>, %arg3: memref<3x3x128xf32, #tpu.memory_space<vmem>>, %arg4: memref<128x128xf32, #tpu.memory_space<vmem>>, %arg5: memref<1x16x16x128xf32, #tpu.memory_space<vmem>>, %arg6: memref<2x18x18x128xf32, #tpu.memory_space<vmem>>, %arg7: memref<2x!tpu.dma_semaphore, #tpu.memory_space<semaphore_mem>>) attributes {dimension_semantics = [#tpu.dimension_semantics<parallel>, #tpu.dimension_semantics<arbitrary>], iteration_bounds = array<i64: 2, 1>, scalar_prefetch = 0 : i64, scratch_operands = 2 : i64, tpu.core_type = #tpu.core_type<tc>, window_params = [{}, {pipeline_mode = #tpu.pipeline_mode<synchronous>, transform_indices = @transform_1, window_bounds = array<i64: 3, 3, 128>}, {pipeline_mode = #tpu.pipeline_mode<synchronous>, transform_indices = @transform_2, window_bounds = array<i64: 128, 128>}, {transform_indices = @transform_3, window_bounds = array<i64: 1, 16, 16, 128>}]} {
    %c2_i32 = arith.constant 2 : i32
    %c0_i32 = arith.constant 0 : i32
    %0 = arith.cmpi eq, %c2_i32, %c0_i32 : i32
    %c1_i32 = arith.constant 1 : i32
    %1 = arith.select %0, %c1_i32, %c2_i32 : i32
    %2 = arith.remsi %arg1, %1 : i32
    %c0_i32_0 = arith.constant 0 : i32
    %3 = arith.cmpi ne, %2, %c0_i32_0 : i32
    %c0_i32_1 = arith.constant 0 : i32
    %4 = arith.cmpi slt, %2, %c0_i32_1 : i32
    %c0_i32_2 = arith.constant 0 : i32
    %5 = arith.cmpi slt, %1, %c0_i32_2 : i32
    %6 = arith.xori %4, %5 : i1
    %7 = arith.andi %6, %3 : i1
    %8 = arith.addi %2, %1 : i32
    %9 = arith.select %7, %8, %2 : i32
    %c0_i32_3 = arith.constant 0 : i32
    %10 = arith.cmpi eq, %arg1, %c0_i32_3 : i32
    %11 = arith.extui %10 : i1 to i32
    %c0_i32_4 = arith.constant 0 : i32
    %12 = arith.cmpi ne, %11, %c0_i32_4 : i32
    scf.if %12 {
      %c0_i32_98 = arith.constant 0 : i32
      %c0_i32_99 = arith.constant 0 : i32
      %c0_i32_100 = arith.constant 0 : i32
      %c0_i32_101 = arith.constant 0 : i32
      %c0_i32_102 = arith.constant 0 : i32
      %113 = tpu.memref_slice %arg2[%arg0, %c0_i32_100, %c0_i32_101, %c0_i32_102] : memref<2x18x18x128xf32, #tpu.memory_space<any>> -> memref<1x18x18x128xf32, #tpu.memory_space<any>>
      %114 = tpu.memref_squeeze %113 : memref<1x18x18x128xf32, #tpu.memory_space<any>> -> memref<18x18x128xf32, #tpu.memory_space<any>>
      %c0_i32_103 = arith.constant 0 : i32
      %c0_i32_104 = arith.constant 0 : i32
      %c0_i32_105 = arith.constant 0 : i32
      %115 = tpu.memref_slice %arg6[%c0_i32_98, %c0_i32_103, %c0_i32_104, %c0_i32_105] : memref<2x18x18x128xf32, #tpu.memory_space<vmem>> -> memref<1x18x18x128xf32, #tpu.memory_space<vmem>>
      %116 = tpu.memref_squeeze %115 : memref<1x18x18x128xf32, #tpu.memory_space<vmem>> -> memref<18x18x128xf32, #tpu.memory_space<vmem>>
      %117 = tpu.memref_slice %arg7[%c0_i32_99] : memref<2x!tpu.dma_semaphore, #tpu.memory_space<semaphore_mem>> -> memref<1x!tpu.dma_semaphore, #tpu.memory_space<semaphore_mem>>
      %118 = tpu.memref_squeeze %117 : memref<1x!tpu.dma_semaphore, #tpu.memory_space<semaphore_mem>> -> memref<!tpu.dma_semaphore, #tpu.memory_space<semaphore_mem>>
      tpu.enqueue_dma source(%114 : memref<18x18x128xf32, #tpu.memory_space<any>>) target(%116 : memref<18x18x128xf32, #tpu.memory_space<vmem>>) target_semaphore(%118 : memref<!tpu.dma_semaphore, #tpu.memory_space<semaphore_mem>>)
    } else {
    }
    %c1_i32_5 = arith.constant 1 : i32
    %13 = arith.addi %arg1, %c1_i32_5 : i32
    %c1_i32_6 = arith.constant 1 : i32
    %14 = arith.cmpi slt, %13, %c1_i32_6 : i32
    %15 = arith.extui %14 : i1 to i32
    %c0_i32_7 = arith.constant 0 : i32
    %16 = arith.cmpi ne, %15, %c0_i32_7 : i32
    scf.if %16 {
      %c1_i32_98 = arith.constant 1 : i32
      %113 = arith.addi %arg1, %c1_i32_98 : i32
      %c1_i32_99 = arith.constant 1 : i32
      %114 = arith.subi %c1_i32_99, %9 : i32
      %c16_i32_100 = arith.constant 16 : i32
      %115 = arith.muli %113, %c16_i32_100 : i32
      %c0_i32_101 = arith.constant 0 : i32
      %c0_i32_102 = arith.constant 0 : i32
      %116 = tpu.memref_slice %arg2[%arg0, %115, %c0_i32_101, %c0_i32_102] : memref<2x18x18x128xf32, #tpu.memory_space<any>> -> memref<1x18x18x128xf32, #tpu.memory_space<any>>
      %117 = tpu.memref_squeeze %116 : memref<1x18x18x128xf32, #tpu.memory_space<any>> -> memref<18x18x128xf32, #tpu.memory_space<any>>
      %c0_i32_103 = arith.constant 0 : i32
      %c0_i32_104 = arith.constant 0 : i32
      %c0_i32_105 = arith.constant 0 : i32
      %118 = tpu.memref_slice %arg6[%114, %c0_i32_103, %c0_i32_104, %c0_i32_105] : memref<2x18x18x128xf32, #tpu.memory_space<vmem>> -> memref<1x18x18x128xf32, #tpu.memory_space<vmem>>
      %119 = tpu.memref_squeeze %118 : memref<1x18x18x128xf32, #tpu.memory_space<vmem>> -> memref<18x18x128xf32, #tpu.memory_space<vmem>>
      %120 = tpu.memref_slice %arg7[%114] : memref<2x!tpu.dma_semaphore, #tpu.memory_space<semaphore_mem>> -> memref<1x!tpu.dma_semaphore, #tpu.memory_space<semaphore_mem>>
      %121 = tpu.memref_squeeze %120 : memref<1x!tpu.dma_semaphore, #tpu.memory_space<semaphore_mem>> -> memref<!tpu.dma_semaphore, #tpu.memory_space<semaphore_mem>>
      tpu.enqueue_dma source(%117 : memref<18x18x128xf32, #tpu.memory_space<any>>) target(%119 : memref<18x18x128xf32, #tpu.memory_space<vmem>>) target_semaphore(%121 : memref<!tpu.dma_semaphore, #tpu.memory_space<semaphore_mem>>)
    } else {
    }
    %c16_i32 = arith.constant 16 : i32
    %17 = arith.muli %arg1, %c16_i32 : i32
    %c0_i32_8 = arith.constant 0 : i32
    %c0_i32_9 = arith.constant 0 : i32
    %18 = tpu.memref_slice %arg2[%arg0, %17, %c0_i32_8, %c0_i32_9] : memref<2x18x18x128xf32, #tpu.memory_space<any>> -> memref<1x18x18x128xf32, #tpu.memory_space<any>>
    %19 = tpu.memref_squeeze %18 : memref<1x18x18x128xf32, #tpu.memory_space<any>> -> memref<18x18x128xf32, #tpu.memory_space<any>>
    %c0_i32_10 = arith.constant 0 : i32
    %c0_i32_11 = arith.constant 0 : i32
    %c0_i32_12 = arith.constant 0 : i32
    %20 = tpu.memref_slice %arg6[%9, %c0_i32_10, %c0_i32_11, %c0_i32_12] : memref<2x18x18x128xf32, #tpu.memory_space<vmem>> -> memref<1x18x18x128xf32, #tpu.memory_space<vmem>>
    %21 = tpu.memref_squeeze %20 : memref<1x18x18x128xf32, #tpu.memory_space<vmem>> -> memref<18x18x128xf32, #tpu.memory_space<vmem>>
    %22 = tpu.memref_slice %arg7[%9] : memref<2x!tpu.dma_semaphore, #tpu.memory_space<semaphore_mem>> -> memref<1x!tpu.dma_semaphore, #tpu.memory_space<semaphore_mem>>
    %23 = tpu.memref_squeeze %22 : memref<1x!tpu.dma_semaphore, #tpu.memory_space<semaphore_mem>> -> memref<!tpu.dma_semaphore, #tpu.memory_space<semaphore_mem>>
    tpu.wait_dma2 semaphore(%23 : memref<!tpu.dma_semaphore, #tpu.memory_space<semaphore_mem>>) src(%19 : memref<18x18x128xf32, #tpu.memory_space<any>>) dst(%21 : memref<18x18x128xf32, #tpu.memory_space<vmem>>)
    %cst = arith.constant 0.000000e+00 : f32
    %24 = vector.broadcast %cst : f32 to vector<256x128xf32>
    %c0_i32_13 = arith.constant 0 : i32
    %c0_i32_14 = arith.constant 0 : i32
    %c0_i32_15 = arith.constant 0 : i32
    %25 = tpu.memref_slice %arg6[%9, %c0_i32_13, %c0_i32_14, %c0_i32_15] : memref<2x18x18x128xf32, #tpu.memory_space<vmem>> -> memref<1x18x18x128xf32, #tpu.memory_space<vmem>>
    %26 = tpu.memref_squeeze %25 : memref<1x18x18x128xf32, #tpu.memory_space<vmem>> -> memref<18x18x128xf32, #tpu.memory_space<vmem>>
    %c0 = arith.constant 0 : index
    %c0_16 = arith.constant 0 : index
    %c0_17 = arith.constant 0 : index
    %27 = vector.load %26[%c0, %c0_16, %c0_17] : memref<18x18x128xf32, #tpu.memory_space<vmem>>, vector<16x16x128xf32>
    %c0_18 = arith.constant 0 : index
    %c0_19 = arith.constant 0 : index
    %c0_20 = arith.constant 0 : index
    %28 = vector.load %arg3[%c0_18, %c0_19, %c0_20] : memref<3x3x128xf32, #tpu.memory_space<vmem>>, vector<1x1x128xf32>
    %29 = vector.shape_cast %28 : vector<1x1x128xf32> to vector<128xf32>
    %30 = vector.shape_cast %29 : vector<128xf32> to vector<1x1x128xf32>
    %31 = vector.broadcast %30 : vector<1x1x128xf32> to vector<16x16x128xf32>
    %32 = arith.mulf %27, %31 : vector<16x16x128xf32>
    %c0_i32_21 = arith.constant 0 : i32
    %c0_i32_22 = arith.constant 0 : i32
    %c0_i32_23 = arith.constant 0 : i32
    %33 = tpu.memref_slice %arg6[%9, %c0_i32_21, %c0_i32_22, %c0_i32_23] : memref<2x18x18x128xf32, #tpu.memory_space<vmem>> -> memref<1x18x18x128xf32, #tpu.memory_space<vmem>>
    %34 = tpu.memref_squeeze %33 : memref<1x18x18x128xf32, #tpu.memory_space<vmem>> -> memref<18x18x128xf32, #tpu.memory_space<vmem>>
    %c0_24 = arith.constant 0 : index
    %c1 = arith.constant 1 : index
    %c0_25 = arith.constant 0 : index
    %35 = vector.load %34[%c0_24, %c1, %c0_25] : memref<18x18x128xf32, #tpu.memory_space<vmem>>, vector<16x16x128xf32>
    %c0_26 = arith.constant 0 : index
    %c1_27 = arith.constant 1 : index
    %c0_28 = arith.constant 0 : index
    %36 = vector.load %arg3[%c0_26, %c1_27, %c0_28] : memref<3x3x128xf32, #tpu.memory_space<vmem>>, vector<1x1x128xf32>
    %37 = vector.shape_cast %36 : vector<1x1x128xf32> to vector<128xf32>
    %38 = vector.shape_cast %37 : vector<128xf32> to vector<1x1x128xf32>
    %39 = vector.broadcast %38 : vector<1x1x128xf32> to vector<16x16x128xf32>
    %40 = arith.mulf %35, %39 : vector<16x16x128xf32>
    %41 = arith.addf %32, %40 : vector<16x16x128xf32>
    %c0_i32_29 = arith.constant 0 : i32
    %c0_i32_30 = arith.constant 0 : i32
    %c0_i32_31 = arith.constant 0 : i32
    %42 = tpu.memref_slice %arg6[%9, %c0_i32_29, %c0_i32_30, %c0_i32_31] : memref<2x18x18x128xf32, #tpu.memory_space<vmem>> -> memref<1x18x18x128xf32, #tpu.memory_space<vmem>>
    %43 = tpu.memref_squeeze %42 : memref<1x18x18x128xf32, #tpu.memory_space<vmem>> -> memref<18x18x128xf32, #tpu.memory_space<vmem>>
    %c0_32 = arith.constant 0 : index
    %c2 = arith.constant 2 : index
    %c0_33 = arith.constant 0 : index
    %44 = vector.load %43[%c0_32, %c2, %c0_33] : memref<18x18x128xf32, #tpu.memory_space<vmem>>, vector<16x16x128xf32>
    %c0_34 = arith.constant 0 : index
    %c2_35 = arith.constant 2 : index
    %c0_36 = arith.constant 0 : index
    %45 = vector.load %arg3[%c0_34, %c2_35, %c0_36] : memref<3x3x128xf32, #tpu.memory_space<vmem>>, vector<1x1x128xf32>
    %46 = vector.shape_cast %45 : vector<1x1x128xf32> to vector<128xf32>
    %47 = vector.shape_cast %46 : vector<128xf32> to vector<1x1x128xf32>
    %48 = vector.broadcast %47 : vector<1x1x128xf32> to vector<16x16x128xf32>
    %49 = arith.mulf %44, %48 : vector<16x16x128xf32>
    %50 = arith.addf %41, %49 : vector<16x16x128xf32>
    %c0_i32_37 = arith.constant 0 : i32
    %c0_i32_38 = arith.constant 0 : i32
    %c0_i32_39 = arith.constant 0 : i32
    %51 = tpu.memref_slice %arg6[%9, %c0_i32_37, %c0_i32_38, %c0_i32_39] : memref<2x18x18x128xf32, #tpu.memory_space<vmem>> -> memref<1x18x18x128xf32, #tpu.memory_space<vmem>>
    %52 = tpu.memref_squeeze %51 : memref<1x18x18x128xf32, #tpu.memory_space<vmem>> -> memref<18x18x128xf32, #tpu.memory_space<vmem>>
    %c1_40 = arith.constant 1 : index
    %c0_41 = arith.constant 0 : index
    %c0_42 = arith.constant 0 : index
    %53 = vector.load %52[%c1_40, %c0_41, %c0_42] : memref<18x18x128xf32, #tpu.memory_space<vmem>>, vector<16x16x128xf32>
    %c1_43 = arith.constant 1 : index
    %c0_44 = arith.constant 0 : index
    %c0_45 = arith.constant 0 : index
    %54 = vector.load %arg3[%c1_43, %c0_44, %c0_45] : memref<3x3x128xf32, #tpu.memory_space<vmem>>, vector<1x1x128xf32>
    %55 = vector.shape_cast %54 : vector<1x1x128xf32> to vector<128xf32>
    %56 = vector.shape_cast %55 : vector<128xf32> to vector<1x1x128xf32>
    %57 = vector.broadcast %56 : vector<1x1x128xf32> to vector<16x16x128xf32>
    %58 = arith.mulf %53, %57 : vector<16x16x128xf32>
    %59 = arith.addf %50, %58 : vector<16x16x128xf32>
    %c0_i32_46 = arith.constant 0 : i32
    %c0_i32_47 = arith.constant 0 : i32
    %c0_i32_48 = arith.constant 0 : i32
    %60 = tpu.memref_slice %arg6[%9, %c0_i32_46, %c0_i32_47, %c0_i32_48] : memref<2x18x18x128xf32, #tpu.memory_space<vmem>> -> memref<1x18x18x128xf32, #tpu.memory_space<vmem>>
    %61 = tpu.memref_squeeze %60 : memref<1x18x18x128xf32, #tpu.memory_space<vmem>> -> memref<18x18x128xf32, #tpu.memory_space<vmem>>
    %c1_49 = arith.constant 1 : index
    %c1_50 = arith.constant 1 : index
    %c0_51 = arith.constant 0 : index
    %62 = vector.load %61[%c1_49, %c1_50, %c0_51] : memref<18x18x128xf32, #tpu.memory_space<vmem>>, vector<16x16x128xf32>
    %c1_52 = arith.constant 1 : index
    %c1_53 = arith.constant 1 : index
    %c0_54 = arith.constant 0 : index
    %63 = vector.load %arg3[%c1_52, %c1_53, %c0_54] : memref<3x3x128xf32, #tpu.memory_space<vmem>>, vector<1x1x128xf32>
    %64 = vector.shape_cast %63 : vector<1x1x128xf32> to vector<128xf32>
    %65 = vector.shape_cast %64 : vector<128xf32> to vector<1x1x128xf32>
    %66 = vector.broadcast %65 : vector<1x1x128xf32> to vector<16x16x128xf32>
    %67 = arith.mulf %62, %66 : vector<16x16x128xf32>
    %68 = arith.addf %59, %67 : vector<16x16x128xf32>
    %c0_i32_55 = arith.constant 0 : i32
    %c0_i32_56 = arith.constant 0 : i32
    %c0_i32_57 = arith.constant 0 : i32
    %69 = tpu.memref_slice %arg6[%9, %c0_i32_55, %c0_i32_56, %c0_i32_57] : memref<2x18x18x128xf32, #tpu.memory_space<vmem>> -> memref<1x18x18x128xf32, #tpu.memory_space<vmem>>
    %70 = tpu.memref_squeeze %69 : memref<1x18x18x128xf32, #tpu.memory_space<vmem>> -> memref<18x18x128xf32, #tpu.memory_space<vmem>>
    %c1_58 = arith.constant 1 : index
    %c2_59 = arith.constant 2 : index
    %c0_60 = arith.constant 0 : index
    %71 = vector.load %70[%c1_58, %c2_59, %c0_60] : memref<18x18x128xf32, #tpu.memory_space<vmem>>, vector<16x16x128xf32>
    %c1_61 = arith.constant 1 : index
    %c2_62 = arith.constant 2 : index
    %c0_63 = arith.constant 0 : index
    %72 = vector.load %arg3[%c1_61, %c2_62, %c0_63] : memref<3x3x128xf32, #tpu.memory_space<vmem>>, vector<1x1x128xf32>
    %73 = vector.shape_cast %72 : vector<1x1x128xf32> to vector<128xf32>
    %74 = vector.shape_cast %73 : vector<128xf32> to vector<1x1x128xf32>
    %75 = vector.broadcast %74 : vector<1x1x128xf32> to vector<16x16x128xf32>
    %76 = arith.mulf %71, %75 : vector<16x16x128xf32>
    %77 = arith.addf %68, %76 : vector<16x16x128xf32>
    %c0_i32_64 = arith.constant 0 : i32
    %c0_i32_65 = arith.constant 0 : i32
    %c0_i32_66 = arith.constant 0 : i32
    %78 = tpu.memref_slice %arg6[%9, %c0_i32_64, %c0_i32_65, %c0_i32_66] : memref<2x18x18x128xf32, #tpu.memory_space<vmem>> -> memref<1x18x18x128xf32, #tpu.memory_space<vmem>>
    %79 = tpu.memref_squeeze %78 : memref<1x18x18x128xf32, #tpu.memory_space<vmem>> -> memref<18x18x128xf32, #tpu.memory_space<vmem>>
    %c2_67 = arith.constant 2 : index
    %c0_68 = arith.constant 0 : index
    %c0_69 = arith.constant 0 : index
    %80 = vector.load %79[%c2_67, %c0_68, %c0_69] : memref<18x18x128xf32, #tpu.memory_space<vmem>>, vector<16x16x128xf32>
    %c2_70 = arith.constant 2 : index
    %c0_71 = arith.constant 0 : index
    %c0_72 = arith.constant 0 : index
    %81 = vector.load %arg3[%c2_70, %c0_71, %c0_72] : memref<3x3x128xf32, #tpu.memory_space<vmem>>, vector<1x1x128xf32>
    %82 = vector.shape_cast %81 : vector<1x1x128xf32> to vector<128xf32>
    %83 = vector.shape_cast %82 : vector<128xf32> to vector<1x1x128xf32>
    %84 = vector.broadcast %83 : vector<1x1x128xf32> to vector<16x16x128xf32>
    %85 = arith.mulf %80, %84 : vector<16x16x128xf32>
    %86 = arith.addf %77, %85 : vector<16x16x128xf32>
    %c0_i32_73 = arith.constant 0 : i32
    %c0_i32_74 = arith.constant 0 : i32
    %c0_i32_75 = arith.constant 0 : i32
    %87 = tpu.memref_slice %arg6[%9, %c0_i32_73, %c0_i32_74, %c0_i32_75] : memref<2x18x18x128xf32, #tpu.memory_space<vmem>> -> memref<1x18x18x128xf32, #tpu.memory_space<vmem>>
    %88 = tpu.memref_squeeze %87 : memref<1x18x18x128xf32, #tpu.memory_space<vmem>> -> memref<18x18x128xf32, #tpu.memory_space<vmem>>
    %c2_76 = arith.constant 2 : index
    %c1_77 = arith.constant 1 : index
    %c0_78 = arith.constant 0 : index
    %89 = vector.load %88[%c2_76, %c1_77, %c0_78] : memref<18x18x128xf32, #tpu.memory_space<vmem>>, vector<16x16x128xf32>
    %c2_79 = arith.constant 2 : index
    %c1_80 = arith.constant 1 : index
    %c0_81 = arith.constant 0 : index
    %90 = vector.load %arg3[%c2_79, %c1_80, %c0_81] : memref<3x3x128xf32, #tpu.memory_space<vmem>>, vector<1x1x128xf32>
    %91 = vector.shape_cast %90 : vector<1x1x128xf32> to vector<128xf32>
    %92 = vector.shape_cast %91 : vector<128xf32> to vector<1x1x128xf32>
    %93 = vector.broadcast %92 : vector<1x1x128xf32> to vector<16x16x128xf32>
    %94 = arith.mulf %89, %93 : vector<16x16x128xf32>
    %95 = arith.addf %86, %94 : vector<16x16x128xf32>
    %c0_i32_82 = arith.constant 0 : i32
    %c0_i32_83 = arith.constant 0 : i32
    %c0_i32_84 = arith.constant 0 : i32
    %96 = tpu.memref_slice %arg6[%9, %c0_i32_82, %c0_i32_83, %c0_i32_84] : memref<2x18x18x128xf32, #tpu.memory_space<vmem>> -> memref<1x18x18x128xf32, #tpu.memory_space<vmem>>
    %97 = tpu.memref_squeeze %96 : memref<1x18x18x128xf32, #tpu.memory_space<vmem>> -> memref<18x18x128xf32, #tpu.memory_space<vmem>>
    %c2_85 = arith.constant 2 : index
    %c2_86 = arith.constant 2 : index
    %c0_87 = arith.constant 0 : index
    %98 = vector.load %97[%c2_85, %c2_86, %c0_87] : memref<18x18x128xf32, #tpu.memory_space<vmem>>, vector<16x16x128xf32>
    %c2_88 = arith.constant 2 : index
    %c2_89 = arith.constant 2 : index
    %c0_90 = arith.constant 0 : index
    %99 = vector.load %arg3[%c2_88, %c2_89, %c0_90] : memref<3x3x128xf32, #tpu.memory_space<vmem>>, vector<1x1x128xf32>
    %100 = vector.shape_cast %99 : vector<1x1x128xf32> to vector<128xf32>
    %101 = vector.shape_cast %100 : vector<128xf32> to vector<1x1x128xf32>
    %102 = vector.broadcast %101 : vector<1x1x128xf32> to vector<16x16x128xf32>
    %103 = arith.mulf %98, %102 : vector<16x16x128xf32>
    %104 = arith.addf %95, %103 : vector<16x16x128xf32>
    %105 = vector.shape_cast %104 : vector<16x16x128xf32> to vector<256x128xf32>
    %c0_91 = arith.constant 0 : index
    %c0_92 = arith.constant 0 : index
    %106 = vector.load %arg4[%c0_91, %c0_92] : memref<128x128xf32, #tpu.memory_space<vmem>>, vector<128x128xf32>
    %cst_93 = arith.constant dense<0.000000e+00> : vector<256x128xf32>
    %107 = tpu.matmul %105, %106, %cst_93 {dimension_numbers = #tpu.dot_dimension_numbers<[1], [0], [0], [1], [0, 0, 1, 1], [], []>} : vector<256x128xf32>, vector<128x128xf32>, vector<256x128xf32> -> vector<256x128xf32>
    %108 = arith.addf %24, %107 : vector<256x128xf32>
    %109 = vector.shape_cast %108 : vector<256x128xf32> to vector<16x16x128xf32>
    %c0_94 = arith.constant 0 : index
    %c0_95 = arith.constant 0 : index
    %c0_96 = arith.constant 0 : index
    %c0_97 = arith.constant 0 : index
    %110 = vector.load %arg5[%c0_94, %c0_95, %c0_96, %c0_97] : memref<1x16x16x128xf32, #tpu.memory_space<vmem>>, vector<1x16x16x128xf32>
    %111 = vector.shape_cast %110 : vector<1x16x16x128xf32> to vector<16x16x128xf32>
    %112 = vector.shape_cast %109 : vector<16x16x128xf32> to vector<1x16x16x128xf32>
    tpu.vector_store %arg5[%c0_94, %c0_95, %c0_96, %c0_97], %112 {strides = array<i32>} : memref<1x16x16x128xf32, #tpu.memory_space<vmem>>, vector<1x16x16x128xf32>,
    return
  }
  func.func @transform_1(%arg0: i32, %arg1: i32) -> (i32, i32, i32) {
    %c0_i32 = arith.constant 0 : i32
    %c0_i32_0 = arith.constant 0 : i32
    %c0_i32_1 = arith.constant 0 : i32
    %c0_i32_2 = arith.constant 0 : i32
    return %c0_i32, %c0_i32_0, %c0_i32_1 : i32, i32, i32
  }
  func.func @transform_2(%arg0: i32, %arg1: i32) -> (i32, i32) {
    %c0_i32 = arith.constant 0 : i32
    %c0_i32_0 = arith.constant 0 : i32
    %c0_i32_1 = arith.constant 0 : i32
    return %c0_i32, %c0_i32_0 : i32, i32
  }
  func.func @transform_3(%arg0: i32, %arg1: i32) -> (i32, i32, i32, i32) {
    %c0_i32 = arith.constant 0 : i32
    %c0_i32_0 = arith.constant 0 : i32
    %c0_i32_1 = arith.constant 0 : i32
    return %arg0, %arg1, %c0_i32, %c0_i32_0 : i32, i32, i32, i32
  }
}

</mosaic_0001>

<llo_original>
// kernel: tpu_custom_call.1
$region0: #{tpu_custom_call.1}
  #allocation0 [shape = 'u32[]', space=smem, size = 0x4, offset = 0x4, fixed_abs, tag = 'smem constant byte address 0x4 - core index']
  #allocation1 [shape = 'u32[144,128]{1,0:T(1,128)}', space=vmem, size = 0x12000, scoped, tag = 'internal scratch']
  #allocation2 [shape = 'f32[2,18,18,128]{3,2,1,0:T(8,128)}', space=vmem, size = 0x6c000, scoped, tag = 'scratch operand']
  #allocation3 [shape = 's32[2]{0}', space=sflag, size = 0x8, scoped, tag = 'scratch operand']
  #allocation6 [shape = 's32[]', space=sflag, size = 0x4, offset = 0, fixed_abs, tag = 'sflag constant byte address 0x0 - dummy sync flag']
  #allocation7 [shape = 's32[]', space=sflag, size = 0x4, offset = 0, fixed_abs, tag = 'sflag constant byte address 0x0 - dummy sync flag']
  %s0 = inlined_call_operand.vmem [shape: f32[2,18,18,128], index: 0, kind: input, shape index: {}]
  %s1 = inlined_call_operand.vmem [shape: f32[3,3,128], index: 1, kind: input, shape index: {}]
  %s2 = inlined_call_operand.vmem [shape: f32[128,128], index: 2, kind: input, shape index: {}]
  %s3 = inlined_call_operand.hbm [shape: f32[2,16,16,128], index: 3, kind: output, shape index: {}]
  %s4 = sld [smem:[#allocation0]]
  $region123: #{tpu_custom_call.1} parent=0
    _
  %s6 = ssub.s32 1, %s4
  %s7 = scalar_select 0, %s6, %s4
  $region1: #{tpu_custom_call.1} parent=0
    #allocation4 [shape = 'u8[262144]{0}', space=vmem, size = 0x40000, scoped, tag = 'output window, operand 0']
    #allocation5 [shape = 's32[2]{0}', space=sflag, size = 0x8, scoped, tag = 'scoped memory for tpu_custom_call.1']
    %8 = vsyncpa [#allocation5], 0
    %s9 = scalar_lea.sflag [#allocation5], 1
    %10 = vsyncpa %s9, 0
    loop: start=0, step=1, limit=4
    $region2: #{tpu_custom_call.1} parent=1 // loop_pre_header
      _
    $region3: #{tpu_custom_call.1} parent=1 // loop_header
      %s12 = sphi 0, %s16
      %p13 = scmp.ge.s32.totalorder %s12, 4
      %s19 = sphi 0, %s31
      %s20 = sphi 0, %s27
      %s21 = sphi 0, %s19
      %s22 = sphi 0, %s20
      %s23 = sphi 0, %s21
      %s24 = sphi 0, %s22
      %s32 = sphi 0, %s32
      %s34 = sphi 0, %s32
      %s35 = sphi 0, %s34
      %s49 = sphi 0, %s35
      %s53 = sphi 0, %s53
      %s55 = sphi 0, %s53
      %s56 = sphi 0, %s55
      %s70 = sphi 0, %s56
      %s78 = sphi 0, %s80
      %s81 = sphi 0, %s78
      %s82 = sphi 0, %s81
      %s98 = sphi 0, %s82
    $region4: #{tpu_custom_call.1} parent=1 // loop_header_branch
      %15 = sbr.rel (%p13) target = $region8
    $region5: #{tpu_custom_call.1} parent=1 // loop_body
      %s17 = ssub.s32 %s12, 1
      %s18 = ssub.s32 %s12, 2
      %s25 = sadd.s32 1, %s20
      %p26 = scmp.ge.s32.totalorder %s25, 1
      %s27 = scalar_select %p26, 0, %s25
      %s28 = sadd.s32 1, %s19
      %s29 = scalar_select %p26, %s28, %s19
      %p30 = scmp.ge.s32.totalorder %s29, 2
      %s31 = scalar_select %p30, 0, %s29
      %s33 = sadd.s32 %s32, 1
      %p36 = scmp.eq.s32.totalorder %s12, 1
      %p37 = scmp.ne.s32.totalorder %s32, %s34
      %p38 = scmp.eq.s32.totalorder %s12, 0
      %p39 = por %p37, %p38
      %p40 = scmp.ne.s32.totalorder %s32, %s34
      %p41 = scmp.eq.s32.totalorder %s17, 1
      %p42 = por %p40, %p41
      %p43 = scmp.ne.s32.totalorder %s34, %s35
      %p44 = scmp.eq.s32.totalorder %s17, 0
      %p45 = por %p43, %p44
      %p46 = scmp.ne.s32.totalorder %s34, %s35
      %p47 = scmp.eq.s32.totalorder %s18, 1
      %p48 = por %p46, %p47
      %p50 = scmp.ne.s32.totalorder %s35, %s49
      %p51 = scmp.eq.s32.totalorder %s18, 0
      %p52 = por %p50, %p51
      %s54 = sadd.s32 %s53, 1
      %p57 = scmp.eq.s32.totalorder %s12, 1
      %p58 = scmp.ne.s32.totalorder %s53, %s55
      %p59 = scmp.eq.s32.totalorder %s12, 0
      %p60 = por %p58, %p59
      %p61 = scmp.ne.s32.totalorder %s53, %s55
      %p62 = scmp.eq.s32.totalorder %s17, 1
      %p63 = por %p61, %p62
      %p64 = scmp.ne.s32.totalorder %s55, %s56
      %p65 = scmp.eq.s32.totalorder %s17, 0
      %p66 = por %p64, %p65
      %p67 = scmp.ne.s32.totalorder %s55, %s56
      %p68 = scmp.eq.s32.totalorder %s18, 1
      %p69 = por %p67, %p68
      %p71 = scmp.ne.s32.totalorder %s56, %s70
      %p72 = scmp.eq.s32.totalorder %s18, 0
      %p73 = por %p71, %p72
      %s74 = ssub.s32 %s19, %s31
      %s75 = ssub.s32 %s20, %s27
      %s76 = sor.u32 %s74, %s75
      %p77 = scmp.eq.s32.totalorder %s76, 0
      %s79 = sadd.s32 %s78, 1
      %s80 = scalar_select %p77, %s78, %s79
      %p83 = pneg %p77
      %p84 = scmp.eq.s32.totalorder %s12, 1
      %p85 = por %p83, %p84
      %p86 = scmp.ne.s32.totalorder %s78, %s81
      %p87 = scmp.eq.s32.totalorder %s12, 0
      %p88 = por %p86, %p87
      %p89 = scmp.ne.s32.totalorder %s78, %s81
      %p90 = scmp.eq.s32.totalorder %s17, 1
      %p91 = por %p89, %p90
      %p92 = scmp.ne.s32.totalorder %s81, %s82
      %p93 = scmp.eq.s32.totalorder %s17, 0
      %p94 = por %p92, %p93
      %p95 = scmp.ne.s32.totalorder %s81, %s82
      %p96 = scmp.eq.s32.totalorder %s18, 1
      %p97 = por %p95, %p96
      %p99 = scmp.ne.s32.totalorder %s82, %s98
      %p100 = scmp.eq.s32.totalorder %s18, 0
      %p101 = por %p99, %p100
      %p102 = scmp.le.s32.totalorder 1, %s12
      %p103 = scmp.lt.s32.totalorder %s12, 3
      %p104 = pnand %p102, %p103
      %p105 = pneg %p104
      // Predicated region
      $region9: #{tpu_custom_call.1} parent=5 // pred_check
        _
      $region10: #{tpu_custom_call.1} parent=5 // pred_check_branch
        %107 = sbr.rel (%p104) target = $region12
      $region11: #{tpu_custom_call.1} parent=5 // pred_region
        %s108 = ssub.s32 %s12, 1
        // Predicated region
        $region13: #{tpu_custom_call.1} parent=11 // pred_check
          %p109 = pneg %p45
        $region14: #{tpu_custom_call.1} parent=11 // pred_check_branch
          %111 = sbr.rel (%p109) target = $region16
        $region15: #{tpu_custom_call.1} parent=11 // pred_region
          _
        $region16: #{tpu_custom_call.1} parent=11 // pred_fallthru
          _
        // Predicated region
        $region17: #{tpu_custom_call.1} parent=11 // pred_check
          %p112 = pneg %p66
        $region18: #{tpu_custom_call.1} parent=11 // pred_check_branch
          %114 = sbr.rel (%p112) target = $region20
        $region19: #{tpu_custom_call.1} parent=11 // pred_region
          _
        $region20: #{tpu_custom_call.1} parent=11 // pred_fallthru
          _
      $region12: #{tpu_custom_call.1} parent=5 // pred_fallthru
        _
      %p115 = scmp.lt.s32.totalorder %s12, 2
      // Predicated region
      $region21: #{tpu_custom_call.1} parent=5 // pred_check
        %p116 = pneg %p115
      $region22: #{tpu_custom_call.1} parent=5 // pred_check_branch
        %118 = sbr.rel (%p116) target = $region24
      $region23: #{tpu_custom_call.1} parent=5 // pred_region
        _
      $region24: #{tpu_custom_call.1} parent=5 // pred_fallthru
        _
      %p119 = scmp.le.s32.totalorder 1, %s12
      %p120 = scmp.lt.s32.totalorder %s12, 3
      %p121 = pnand %p119, %p120
      %p122 = pneg %p121
      // Predicated region
      $region25: #{tpu_custom_call.1} parent=5 // pred_check
        _
      $region26: #{tpu_custom_call.1} parent=5 // pred_check_branch
        %124 = sbr.rel (%p121) target = $region28
      $region27: #{tpu_custom_call.1} parent=5 // pred_region
        %s125 = ssub.s32 %s12, 1
        %p126 = pneg %p45
        %p127 = pneg %p42
        %p128 = pneg %p66
        %p129 = pneg %p63
        %p130 = pneg %p94
        %p131 = pneg %p91
        %s132 = sand.u32 %s81, 1
        %s133 = scalar_lea.sflag [#allocation5], %s132
        %s134 = sand.u32 %s81, 1
        %s135 = smul.addr %s134, 256
        %s136 = scalar_lea.vmem [#allocation4], %s135
        %s137 = smul.u32 16, %s22
        %p138 = scmp.lt.s32.totalorder %s22, 0
        %s139 = ssub.s32 0, %s22
        %s140 = scalar_select %p138, %s139, %s22
        %s141 = sand.u32 %s140, 1
        %s142 = ssub.s32 0, %s141
        %s143 = scalar_select %p138, %s142, %s141
        %p144 = scmp.ne.s32.totalorder %s143, 0
        %p145 = scmp.lt.s32.totalorder %s143, 0
        %p146 = pnand %p145, %p144
        %p147 = pneg %p146
        %s148 = sadd.s32 %s143, 2
        %s149 = scalar_select %p147, %s148, %s143
        %p150 = scmp.eq.s32.totalorder %s22, 0
        // Predicated region
        $region29: #{tpu_custom_call.1} parent=27 // pred_check
          %p151 = pneg %p150
        $region30: #{tpu_custom_call.1} parent=27 // pred_check_branch
          %153 = sbr.rel (%p151) target = $region32
        $region31: #{tpu_custom_call.1} parent=27 // pred_region
          %s154 = smul.u32 %s21, 432
          %s155 = scalar_lea.vmem %s0, %s154
          %p157 = scmp.lt.u32.totalorder 18, 8
          %p158 = pneg %p157
          // Predicated region
          $region33: #{tpu_custom_call.1} parent=31 // pred_check
            _
          $region34: #{tpu_custom_call.1} parent=31 // pred_check_branch
            %160 = sbr.rel (%p157) target = $region36
          $region35: #{tpu_custom_call.1} parent=31 // pred_region
            %s209 = sand.u32 18, 7
            %p210 = scmp.eq.s32.totalorder %s209, 0
            %p211 = pneg %p210
            // Predicated region
            $region48: #{tpu_custom_call.1} parent=35 // pred_check
              _
            $region49: #{tpu_custom_call.1} parent=35 // pred_check_branch
              %213 = sbr.rel (%p210) target = $region51
            $region50: #{tpu_custom_call.1} parent=35 // pred_region
              %s214 = sand.u32 18, 7
              %s215 = ssub.s32 18, %s214
              %s216 = scalar_lea.vmem %s155, %s215
              %s217 = ssub.s32 18, %s214
              %s218 = scalar_lea.vmem [#allocation2], %s217
              loop: start=0, step=1, limit=1
              $region52: #{tpu_custom_call.1} parent=50 // loop_pre_header
                _
              $region53: #{tpu_custom_call.1} parent=50 // loop_header
                %s220 = sphi 0, %s224
                %p221 = scmp.ge.s32.totalorder %s220, 1
                %s225 = sphi %s155, %s155
                %s226 = sphi [#allocation2], [#allocation2]
              $region54: #{tpu_custom_call.1} parent=50 // loop_header_branch
                %223 = sbr.rel (%p221) target = $region58
              $region55: #{tpu_custom_call.1} parent=50 // loop_body
                %v227 = vld [vmem:[%s225] sm:$0xff]
                %228 = vst [vmem:[%s226] sm:$0xff] %v227
                %v229 = vld [vmem:[%s225 + $0x8] sm:$0xff]
                %230 = vst [vmem:[%s226 + $0x8] sm:$0xff] %v229
                %v231 = vld [vmem:[%s225 + $0x18] sm:$0xff]
                %232 = vst [vmem:[%s226 + $0x18] sm:$0xff] %v231
                %v233 = vld [vmem:[%s225 + $0x20] sm:$0xff]
                %234 = vst [vmem:[%s226 + $0x20] sm:$0xff] %v233
                %v235 = vld [vmem:[%s225 + $0x30] sm:$0xff]
                %236 = vst [vmem:[%s226 + $0x30] sm:$0xff] %v235
                %v237 = vld [vmem:[%s225 + $0x38] sm:$0xff]
                %238 = vst [vmem:[%s226 + $0x38] sm:$0xff] %v237
                %v239 = vld [vmem:[%s225 + $0x48] sm:$0xff]
                %240 = vst [vmem:[%s226 + $0x48] sm:$0xff] %v239
                %v241 = vld [vmem:[%s225 + $0x50] sm:$0xff]
                %242 = vst [vmem:[%s226 + $0x50] sm:$0xff] %v241
                %v243 = vld [vmem:[%s225 + $0x60] sm:$0xff]
                %244 = vst [vmem:[%s226 + $0x60] sm:$0xff] %v243
                %v245 = vld [vmem:[%s225 + $0x68] sm:$0xff]
                %246 = vst [vmem:[%s226 + $0x68] sm:$0xff] %v245
                %v247 = vld [vmem:[%s225 + $0x78] sm:$0xff]
                %248 = vst [vmem:[%s226 + $0x78] sm:$0xff] %v247
                %v249 = vld [vmem:[%s225 + $0x80] sm:$0xff]
                %250 = vst [vmem:[%s226 + $0x80] sm:$0xff] %v249
                %v251 = vld [vmem:[%s225 + $0x90] sm:$0xff]
                %252 = vst [vmem:[%s226 + $0x90] sm:$0xff] %v251
                %v253 = vld [vmem:[%s225 + $0x98] sm:$0xff]
                %254 = vst [vmem:[%s226 + $0x98] sm:$0xff] %v253
                %v255 = vld [vmem:[%s225 + $0xa8] sm:$0xff]
                %256 = vst [vmem:[%s226 + $0xa8] sm:$0xff] %v255
                %v257 = vld [vmem:[%s225 + $0xb0] sm:$0xff]
                %258 = vst [vmem:[%s226 + $0xb0] sm:$0xff] %v257
                %v259 = vld [vmem:[%s225 + $0xc0] sm:$0xff]
                %260 = vst [vmem:[%s226 + $0xc0] sm:$0xff] %v259
                %v261 = vld [vmem:[%s225 + $0xc8] sm:$0xff]
                %262 = vst [vmem:[%s226 + $0xc8] sm:$0xff] %v261
                %v263 = vld [vmem:[%s225 + $0xd8] sm:$0xff]
                %264 = vst [vmem:[%s226 + $0xd8] sm:$0xff] %v263
                %v265 = vld [vmem:[%s225 + $0xe0] sm:$0xff]
                %266 = vst [vmem:[%s226 + $0xe0] sm:$0xff] %v265
                %v267 = vld [vmem:[%s225 + $0xf0] sm:$0xff]
                %268 = vst [vmem:[%s226 + $0xf0] sm:$0xff] %v267
                %v269 = vld [vmem:[%s225 + $0xf8] sm:$0xff]
                %270 = vst [vmem:[%s226 + $0xf8] sm:$0xff] %v269
                %v271 = vld [vmem:[%s225 + $0x108] sm:$0xff]
                %272 = vst [vmem:[%s226 + $0x108] sm:$0xff] %v271
                %v273 = vld [vmem:[%s225 + $0x110] sm:$0xff]
                %274 = vst [vmem:[%s226 + $0x110] sm:$0xff] %v273
                %v275 = vld [vmem:[%s225 + $0x120] sm:$0xff]
                %276 = vst [vmem:[%s226 + $0x120] sm:$0xff] %v275
                %v277 = vld [vmem:[%s225 + $0x128] sm:$0xff]
                %278 = vst [vmem:[%s226 + $0x128] sm:$0xff] %v277
                %v279 = vld [vmem:[%s225 + $0x138] sm:$0xff]
                %280 = vst [vmem:[%s226 + $0x138] sm:$0xff] %v279
                %v281 = vld [vmem:[%s225 + $0x140] sm:$0xff]
                %282 = vst [vmem:[%s226 + $0x140] sm:$0xff] %v281
                %v283 = vld [vmem:[%s225 + $0x150] sm:$0xff]
                %284 = vst [vmem:[%s226 + $0x150] sm:$0xff] %v283
                %v285 = vld [vmem:[%s225 + $0x158] sm:$0xff]
                %286 = vst [vmem:[%s226 + $0x158] sm:$0xff] %v285
                %v287 = vld [vmem:[%s225 + $0x168] sm:$0xff]
                %288 = vst [vmem:[%s226 + $0x168] sm:$0xff] %v287
                %v289 = vld [vmem:[%s225 + $0x170] sm:$0xff]
                %290 = vst [vmem:[%s226 + $0x170] sm:$0xff] %v289
                %v291 = vld [vmem:[%s225 + $0x180] sm:$0xff]
                %292 = vst [vmem:[%s226 + $0x180] sm:$0xff] %v291
                %v293 = vld [vmem:[%s225 + $0x188] sm:$0xff]
                %294 = vst [vmem:[%s226 + $0x188] sm:$0xff] %v293
                %v295 = vld [vmem:[%s225 + $0x198] sm:$0xff]
                %296 = vst [vmem:[%s226 + $0x198] sm:$0xff] %v295
                %v297 = vld [vmem:[%s225 + $0x1a0] sm:$0xff]
                %298 = vst [vmem:[%s226 + $0x1a0] sm:$0xff] %v297
              $region56: #{tpu_custom_call.1} parent=50 // loop_footer
                %s224 = sadd.s32 1, %s220
              $region57: #{tpu_custom_call.1} parent=50 // loop_footer_branch
                %219 = sbr.rel target = $region53
              $region58: #{tpu_custom_call.1} parent=50 // loop_exit
                _
              %s299 = sshllo.u32 0, %s214
              loop: start=0, step=1, limit=1
              $region59: #{tpu_custom_call.1} parent=50 // loop_pre_header
                _
              $region60: #{tpu_custom_call.1} parent=50 // loop_header
                %s301 = sphi 0, %s305
                %p302 = scmp.ge.s32.totalorder %s301, 1
                %s306 = sphi %s216, %s216
                %s307 = sphi %s218, %s218
              $region61: #{tpu_custom_call.1} parent=50 // loop_header_branch
                %304 = sbr.rel (%p302) target = $region65
              $region62: #{tpu_custom_call.1} parent=50 // loop_body
                %v308 = vld [vmem:[%s306] sm:%s299]
                %309 = vst [vmem:[%s307] sm:%s299] %v308
                %v310 = vld [vmem:[%s306 + $0x18] sm:%s299]
                %311 = vst [vmem:[%s307 + $0x18] sm:%s299] %v310
                %v312 = vld [vmem:[%s306 + $0x30] sm:%s299]
                %313 = vst [vmem:[%s307 + $0x30] sm:%s299] %v312
                %v314 = vld [vmem:[%s306 + $0x48] sm:%s299]
                %315 = vst [vmem:[%s307 + $0x48] sm:%s299] %v314
                %v316 = vld [vmem:[%s306 + $0x60] sm:%s299]
                %317 = vst [vmem:[%s307 + $0x60] sm:%s299] %v316
                %v318 = vld [vmem:[%s306 + $0x78] sm:%s299]
                %319 = vst [vmem:[%s307 + $0x78] sm:%s299] %v318
                %v320 = vld [vmem:[%s306 + $0x90] sm:%s299]
                %321 = vst [vmem:[%s307 + $0x90] sm:%s299] %v320
                %v322 = vld [vmem:[%s306 + $0xa8] sm:%s299]
                %323 = vst [vmem:[%s307 + $0xa8] sm:%s299] %v322
                %v324 = vld [vmem:[%s306 + $0xc0] sm:%s299]
                %325 = vst [vmem:[%s307 + $0xc0] sm:%s299] %v324
                %v326 = vld [vmem:[%s306 + $0xd8] sm:%s299]
                %327 = vst [vmem:[%s307 + $0xd8] sm:%s299] %v326
                %v328 = vld [vmem:[%s306 + $0xf0] sm:%s299]
                %329 = vst [vmem:[%s307 + $0xf0] sm:%s299] %v328
                %v330 = vld [vmem:[%s306 + $0x108] sm:%s299]
                %331 = vst [vmem:[%s307 + $0x108] sm:%s299] %v330
                %v332 = vld [vmem:[%s306 + $0x120] sm:%s299]
                %333 = vst [vmem:[%s307 + $0x120] sm:%s299] %v332
                %v334 = vld [vmem:[%s306 + $0x138] sm:%s299]
                %335 = vst [vmem:[%s307 + $0x138] sm:%s299] %v334
                %v336 = vld [vmem:[%s306 + $0x150] sm:%s299]
                %337 = vst [vmem:[%s307 + $0x150] sm:%s299] %v336
                %v338 = vld [vmem:[%s306 + $0x168] sm:%s299]
                %339 = vst [vmem:[%s307 + $0x168] sm:%s299] %v338
                %v340 = vld [vmem:[%s306 + $0x180] sm:%s299]
                %341 = vst [vmem:[%s307 + $0x180] sm:%s299] %v340
                %v342 = vld [vmem:[%s306 + $0x198] sm:%s299]
                %343 = vst [vmem:[%s307 + $0x198] sm:%s299] %v342
              $region63: #{tpu_custom_call.1} parent=50 // loop_footer
                %s305 = sadd.s32 1, %s301
              $region64: #{tpu_custom_call.1} parent=50 // loop_footer_branch
                %300 = sbr.rel target = $region60
              $region65: #{tpu_custom_call.1} parent=50 // loop_exit
                _
            $region51: #{tpu_custom_call.1} parent=35 // pred_fallthru
              _
          $region36: #{tpu_custom_call.1} parent=31 // pred_fallthru
            _
          // Predicated region
          $region37: #{tpu_custom_call.1} parent=31 // pred_check
            %p161 = pneg %p157
          $region38: #{tpu_custom_call.1} parent=31 // pred_check_branch
            %163 = sbr.rel (%p161) target = $region40
          $region39: #{tpu_custom_call.1} parent=31 // pred_region
            %s164 = sshllo.u32 0, 18
            loop: start=0, step=1, limit=1
            $region41: #{tpu_custom_call.1} parent=39 // loop_pre_header
              _
            $region42: #{tpu_custom_call.1} parent=39 // loop_header
              %s166 = sphi 0, %s170
              %p167 = scmp.ge.s32.totalorder %s166, 1
              %s171 = sphi %s155, %s155
              %s172 = sphi [#allocation2], [#allocation2]
            $region43: #{tpu_custom_call.1} parent=39 // loop_header_branch
              %169 = sbr.rel (%p167) target = $region47
            $region44: #{tpu_custom_call.1} parent=39 // loop_body
              %v173 = vld [vmem:[%s171] sm:%s164]
              %174 = vst [vmem:[%s172] sm:%s164] %v173
              %v175 = vld [vmem:[%s171 + $0x18] sm:%s164]
              %176 = vst [vmem:[%s172 + $0x18] sm:%s164] %v175
              %v177 = vld [vmem:[%s171 + $0x30] sm:%s164]
              %178 = vst [vmem:[%s172 + $0x30] sm:%s164] %v177
              %v179 = vld [vmem:[%s171 + $0x48] sm:%s164]
              %180 = vst [vmem:[%s172 + $0x48] sm:%s164] %v179
              %v181 = vld [vmem:[%s171 + $0x60] sm:%s164]
              %182 = vst [vmem:[%s172 + $0x60] sm:%s164] %v181
              %v183 = vld [vmem:[%s171 + $0x78] sm:%s164]
              %184 = vst [vmem:[%s172 + $0x78] sm:%s164] %v183
              %v185 = vld [vmem:[%s171 + $0x90] sm:%s164]
              %186 = vst [vmem:[%s172 + $0x90] sm:%s164] %v185
              %v187 = vld [vmem:[%s171 + $0xa8] sm:%s164]
              %188 = vst [vmem:[%s172 + $0xa8] sm:%s164] %v187
              %v189 = vld [vmem:[%s171 + $0xc0] sm:%s164]
              %190 = vst [vmem:[%s172 + $0xc0] sm:%s164] %v189
              %v191 = vld [vmem:[%s171 + $0xd8] sm:%s164]
              %192 = vst [vmem:[%s172 + $0xd8] sm:%s164] %v191
              %v193 = vld [vmem:[%s171 + $0xf0] sm:%s164]
              %194 = vst [vmem:[%s172 + $0xf0] sm:%s164] %v193
              %v195 = vld [vmem:[%s171 + $0x108] sm:%s164]
              %196 = vst [vmem:[%s172 + $0x108] sm:%s164] %v195
              %v197 = vld [vmem:[%s171 + $0x120] sm:%s164]
              %198 = vst [vmem:[%s172 + $0x120] sm:%s164] %v197
              %v199 = vld [vmem:[%s171 + $0x138] sm:%s164]
              %200 = vst [vmem:[%s172 + $0x138] sm:%s164] %v199
              %v201 = vld [vmem:[%s171 + $0x150] sm:%s164]
              %202 = vst [vmem:[%s172 + $0x150] sm:%s164] %v201
              %v203 = vld [vmem:[%s171 + $0x168] sm:%s164]
              %204 = vst [vmem:[%s172 + $0x168] sm:%s164] %v203
              %v205 = vld [vmem:[%s171 + $0x180] sm:%s164]
              %206 = vst [vmem:[%s172 + $0x180] sm:%s164] %v205
              %v207 = vld [vmem:[%s171 + $0x198] sm:%s164]
              %208 = vst [vmem:[%s172 + $0x198] sm:%s164] %v207
            $region45: #{tpu_custom_call.1} parent=39 // loop_footer
              %s170 = sadd.s32 1, %s166
            $region46: #{tpu_custom_call.1} parent=39 // loop_footer_branch
              %165 = sbr.rel target = $region42
            $region47: #{tpu_custom_call.1} parent=39 // loop_exit
              _
          $region40: #{tpu_custom_call.1} parent=31 // pred_fallthru
            _
          // Predicated region
          $region66: #{tpu_custom_call.1} parent=31 // pred_check
            _
          $region67: #{tpu_custom_call.1} parent=31 // pred_check_branch
            %346 = sbr.rel (0) target = $region69
          $region68: #{tpu_custom_call.1} parent=31 // pred_region
            %347 = vsyncadd [#allocation3], 5184
          $region69: #{tpu_custom_call.1} parent=31 // pred_fallthru
            _
        $region32: #{tpu_custom_call.1} parent=27 // pred_fallthru
          _
        %s348 = sadd.s32 %s22, 1
        %p349 = scmp.lt.s32.totalorder %s348, 1
        // Predicated region
        $region70: #{tpu_custom_call.1} parent=27 // pred_check
          %p350 = pneg %p349
        $region71: #{tpu_custom_call.1} parent=27 // pred_check_branch
          %352 = sbr.rel (%p350) target = $region73
        $region72: #{tpu_custom_call.1} parent=27 // pred_region
          %s353 = ssub.s32 1, %s149
          %s354 = smul.u32 %s348, 16
          %s355 = smul.u32 %s354, 24
          %s356 = smul.u32 %s21, 432
          %s357 = sadd.s32 %s355, %s356
          %s358 = scalar_lea.vmem %s0, %s357
          %s359 = smul.u32 %s353, 432
          %s360 = scalar_lea.vmem [#allocation2], %s359
          %s361 = scalar_lea.sflag [#allocation3], %s353
          %p363 = scmp.lt.u32.totalorder 18, 8
          %p364 = pneg %p363
          // Predicated region
          $region74: #{tpu_custom_call.1} parent=72 // pred_check
            _
          $region75: #{tpu_custom_call.1} parent=72 // pred_check_branch
            %366 = sbr.rel (%p363) target = $region77
          $region76: #{tpu_custom_call.1} parent=72 // pred_region
            %s415 = sand.u32 18, 7
            %p416 = scmp.eq.s32.totalorder %s415, 0
            %p417 = pneg %p416
            // Predicated region
            $region89: #{tpu_custom_call.1} parent=76 // pred_check
              _
            $region90: #{tpu_custom_call.1} parent=76 // pred_check_branch
              %419 = sbr.rel (%p416) target = $region92
            $region91: #{tpu_custom_call.1} parent=76 // pred_region
              %s420 = sand.u32 18, 7
              %s421 = ssub.s32 18, %s420
              %s422 = scalar_lea.vmem %s358, %s421
              %s423 = ssub.s32 18, %s420
              %s424 = scalar_lea.vmem %s360, %s423 [#allocation2]
              loop: start=0, step=1, limit=1
              $region93: #{tpu_custom_call.1} parent=91 // loop_pre_header
                _
              $region94: #{tpu_custom_call.1} parent=91 // loop_header
                %s426 = sphi 0, %s430
                %p427 = scmp.ge.s32.totalorder %s426, 1
                %s431 = sphi %s358, %s358
                %s432 = sphi %s360, %s360
              $region95: #{tpu_custom_call.1} parent=91 // loop_header_branch
                %429 = sbr.rel (%p427) target = $region99
              $region96: #{tpu_custom_call.1} parent=91 // loop_body
                %v433 = vld [vmem:[%s431] sm:$0xff]
                %434 = vst [vmem:[%s432] sm:$0xff] %v433
                %v435 = vld [vmem:[%s431 + $0x8] sm:$0xff]
                %436 = vst [vmem:[%s432 + $0x8] sm:$0xff] %v435
                %v437 = vld [vmem:[%s431 + $0x18] sm:$0xff]
                %438 = vst [vmem:[%s432 + $0x18] sm:$0xff] %v437
                %v439 = vld [vmem:[%s431 + $0x20] sm:$0xff]
                %440 = vst [vmem:[%s432 + $0x20] sm:$0xff] %v439
                %v441 = vld [vmem:[%s431 + $0x30] sm:$0xff]
                %442 = vst [vmem:[%s432 + $0x30] sm:$0xff] %v441
                %v443 = vld [vmem:[%s431 + $0x38] sm:$0xff]
                %444 = vst [vmem:[%s432 + $0x38] sm:$0xff] %v443
                %v445 = vld [vmem:[%s431 + $0x48] sm:$0xff]
                %446 = vst [vmem:[%s432 + $0x48] sm:$0xff] %v445
                %v447 = vld [vmem:[%s431 + $0x50] sm:$0xff]
                %448 = vst [vmem:[%s432 + $0x50] sm:$0xff] %v447
                %v449 = vld [vmem:[%s431 + $0x60] sm:$0xff]
                %450 = vst [vmem:[%s432 + $0x60] sm:$0xff] %v449
                %v451 = vld [vmem:[%s431 + $0x68] sm:$0xff]
                %452 = vst [vmem:[%s432 + $0x68] sm:$0xff] %v451
                %v453 = vld [vmem:[%s431 + $0x78] sm:$0xff]
                %454 = vst [vmem:[%s432 + $0x78] sm:$0xff] %v453
                %v455 = vld [vmem:[%s431 + $0x80] sm:$0xff]
                %456 = vst [vmem:[%s432 + $0x80] sm:$0xff] %v455
                %v457 = vld [vmem:[%s431 + $0x90] sm:$0xff]
                %458 = vst [vmem:[%s432 + $0x90] sm:$0xff] %v457
                %v459 = vld [vmem:[%s431 + $0x98] sm:$0xff]
                %460 = vst [vmem:[%s432 + $0x98] sm:$0xff] %v459
                %v461 = vld [vmem:[%s431 + $0xa8] sm:$0xff]
                %462 = vst [vmem:[%s432 + $0xa8] sm:$0xff] %v461
                %v463 = vld [vmem:[%s431 + $0xb0] sm:$0xff]
                %464 = vst [vmem:[%s432 + $0xb0] sm:$0xff] %v463
                %v465 = vld [vmem:[%s431 + $0xc0] sm:$0xff]
                %466 = vst [vmem:[%s432 + $0xc0] sm:$0xff] %v465
                %v467 = vld [vmem:[%s431 + $0xc8] sm:$0xff]
                %468 = vst [vmem:[%s432 + $0xc8] sm:$0xff] %v467
                %v469 = vld [vmem:[%s431 + $0xd8] sm:$0xff]
                %470 = vst [vmem:[%s432 + $0xd8] sm:$0xff] %v469
                %v471 = vld [vmem:[%s431 + $0xe0] sm:$0xff]
                %472 = vst [vmem:[%s432 + $0xe0] sm:$0xff] %v471
                %v473 = vld [vmem:[%s431 + $0xf0] sm:$0xff]
                %474 = vst [vmem:[%s432 + $0xf0] sm:$0xff] %v473
                %v475 = vld [vmem:[%s431 + $0xf8] sm:$0xff]
                %476 = vst [vmem:[%s432 + $0xf8] sm:$0xff] %v475
                %v477 = vld [vmem:[%s431 + $0x108] sm:$0xff]
                %478 = vst [vmem:[%s432 + $0x108] sm:$0xff] %v477
                %v479 = vld [vmem:[%s431 + $0x110] sm:$0xff]
                %480 = vst [vmem:[%s432 + $0x110] sm:$0xff] %v479
                %v481 = vld [vmem:[%s431 + $0x120] sm:$0xff]
                %482 = vst [vmem:[%s432 + $0x120] sm:$0xff] %v481
                %v483 = vld [vmem:[%s431 + $0x128] sm:$0xff]
                %484 = vst [vmem:[%s432 + $0x128] sm:$0xff] %v483
                %v485 = vld [vmem:[%s431 + $0x138] sm:$0xff]
                %486 = vst [vmem:[%s432 + $0x138] sm:$0xff] %v485
                %v487 = vld [vmem:[%s431 + $0x140] sm:$0xff]
                %488 = vst [vmem:[%s432 + $0x140] sm:$0xff] %v487
                %v489 = vld [vmem:[%s431 + $0x150] sm:$0xff]
                %490 = vst [vmem:[%s432 + $0x150] sm:$0xff] %v489
                %v491 = vld [vmem:[%s431 + $0x158] sm:$0xff]
                %492 = vst [vmem:[%s432 + $0x158] sm:$0xff] %v491
                %v493 = vld [vmem:[%s431 + $0x168] sm:$0xff]
                %494 = vst [vmem:[%s432 + $0x168] sm:$0xff] %v493
                %v495 = vld [vmem:[%s431 + $0x170] sm:$0xff]
                %496 = vst [vmem:[%s432 + $0x170] sm:$0xff] %v495
                %v497 = vld [vmem:[%s431 + $0x180] sm:$0xff]
                %498 = vst [vmem:[%s432 + $0x180] sm:$0xff] %v497
                %v499 = vld [vmem:[%s431 + $0x188] sm:$0xff]
                %500 = vst [vmem:[%s432 + $0x188] sm:$0xff] %v499
                %v501 = vld [vmem:[%s431 + $0x198] sm:$0xff]
                %502 = vst [vmem:[%s432 + $0x198] sm:$0xff] %v501
                %v503 = vld [vmem:[%s431 + $0x1a0] sm:$0xff]
                %504 = vst [vmem:[%s432 + $0x1a0] sm:$0xff] %v503
              $region97: #{tpu_custom_call.1} parent=91 // loop_footer
                %s430 = sadd.s32 1, %s426
              $region98: #{tpu_custom_call.1} parent=91 // loop_footer_branch
                %425 = sbr.rel target = $region94
              $region99: #{tpu_custom_call.1} parent=91 // loop_exit
                _
              %s505 = sshllo.u32 0, %s420
              loop: start=0, step=1, limit=1
              $region100: #{tpu_custom_call.1} parent=91 // loop_pre_header
                _
              $region101: #{tpu_custom_call.1} parent=91 // loop_header
                %s507 = sphi 0, %s511
                %p508 = scmp.ge.s32.totalorder %s507, 1
                %s512 = sphi %s422, %s422
                %s513 = sphi %s424, %s424
              $region102: #{tpu_custom_call.1} parent=91 // loop_header_branch
                %510 = sbr.rel (%p508) target = $region106
              $region103: #{tpu_custom_call.1} parent=91 // loop_body
                %v514 = vld [vmem:[%s512] sm:%s505]
                %515 = vst [vmem:[%s513] sm:%s505] %v514
                %v516 = vld [vmem:[%s512 + $0x18] sm:%s505]
                %517 = vst [vmem:[%s513 + $0x18] sm:%s505] %v516
                %v518 = vld [vmem:[%s512 + $0x30] sm:%s505]
                %519 = vst [vmem:[%s513 + $0x30] sm:%s505] %v518
                %v520 = vld [vmem:[%s512 + $0x48] sm:%s505]
                %521 = vst [vmem:[%s513 + $0x48] sm:%s505] %v520
                %v522 = vld [vmem:[%s512 + $0x60] sm:%s505]
                %523 = vst [vmem:[%s513 + $0x60] sm:%s505] %v522
                %v524 = vld [vmem:[%s512 + $0x78] sm:%s505]
                %525 = vst [vmem:[%s513 + $0x78] sm:%s505] %v524
                %v526 = vld [vmem:[%s512 + $0x90] sm:%s505]
                %527 = vst [vmem:[%s513 + $0x90] sm:%s505] %v526
                %v528 = vld [vmem:[%s512 + $0xa8] sm:%s505]
                %529 = vst [vmem:[%s513 + $0xa8] sm:%s505] %v528
                %v530 = vld [vmem:[%s512 + $0xc0] sm:%s505]
                %531 = vst [vmem:[%s513 + $0xc0] sm:%s505] %v530
                %v532 = vld [vmem:[%s512 + $0xd8] sm:%s505]
                %533 = vst [vmem:[%s513 + $0xd8] sm:%s505] %v532
                %v534 = vld [vmem:[%s512 + $0xf0] sm:%s505]
                %535 = vst [vmem:[%s513 + $0xf0] sm:%s505] %v534
                %v536 = vld [vmem:[%s512 + $0x108] sm:%s505]
                %537 = vst [vmem:[%s513 + $0x108] sm:%s505] %v536
                %v538 = vld [vmem:[%s512 + $0x120] sm:%s505]
                %539 = vst [vmem:[%s513 + $0x120] sm:%s505] %v538
                %v540 = vld [vmem:[%s512 + $0x138] sm:%s505]
                %541 = vst [vmem:[%s513 + $0x138] sm:%s505] %v540
                %v542 = vld [vmem:[%s512 + $0x150] sm:%s505]
                %543 = vst [vmem:[%s513 + $0x150] sm:%s505] %v542
                %v544 = vld [vmem:[%s512 + $0x168] sm:%s505]
                %545 = vst [vmem:[%s513 + $0x168] sm:%s505] %v544
                %v546 = vld [vmem:[%s512 + $0x180] sm:%s505]
                %547 = vst [vmem:[%s513 + $0x180] sm:%s505] %v546
                %v548 = vld [vmem:[%s512 + $0x198] sm:%s505]
                %549 = vst [vmem:[%s513 + $0x198] sm:%s505] %v548
              $region104: #{tpu_custom_call.1} parent=91 // loop_footer
                %s511 = sadd.s32 1, %s507
              $region105: #{tpu_custom_call.1} parent=91 // loop_footer_branch
                %506 = sbr.rel target = $region101
              $region106: #{tpu_custom_call.1} parent=91 // loop_exit
                _
            $region92: #{tpu_custom_call.1} parent=76 // pred_fallthru
              _
          $region77: #{tpu_custom_call.1} parent=72 // pred_fallthru
            _
          // Predicated region
          $region78: #{tpu_custom_call.1} parent=72 // pred_check
            %p367 = pneg %p363
          $region79: #{tpu_custom_call.1} parent=72 // pred_check_branch
            %369 = sbr.rel (%p367) target = $region81
          $region80: #{tpu_custom_call.1} parent=72 // pred_region
            %s370 = sshllo.u32 0, 18
            loop: start=0, step=1, limit=1
            $region82: #{tpu_custom_call.1} parent=80 // loop_pre_header
              _
            $region83: #{tpu_custom_call.1} parent=80 // loop_header
              %s372 = sphi 0, %s376
              %p373 = scmp.ge.s32.totalorder %s372, 1
              %s377 = sphi %s358, %s358
              %s378 = sphi %s360, %s360
            $region84: #{tpu_custom_call.1} parent=80 // loop_header_branch
              %375 = sbr.rel (%p373) target = $region88
            $region85: #{tpu_custom_call.1} parent=80 // loop_body
              %v379 = vld [vmem:[%s377] sm:%s370]
              %380 = vst [vmem:[%s378] sm:%s370] %v379
              %v381 = vld [vmem:[%s377 + $0x18] sm:%s370]
              %382 = vst [vmem:[%s378 + $0x18] sm:%s370] %v381
              %v383 = vld [vmem:[%s377 + $0x30] sm:%s370]
              %384 = vst [vmem:[%s378 + $0x30] sm:%s370] %v383
              %v385 = vld [vmem:[%s377 + $0x48] sm:%s370]
              %386 = vst [vmem:[%s378 + $0x48] sm:%s370] %v385
              %v387 = vld [vmem:[%s377 + $0x60] sm:%s370]
              %388 = vst [vmem:[%s378 + $0x60] sm:%s370] %v387
              %v389 = vld [vmem:[%s377 + $0x78] sm:%s370]
              %390 = vst [vmem:[%s378 + $0x78] sm:%s370] %v389
              %v391 = vld [vmem:[%s377 + $0x90] sm:%s370]
              %392 = vst [vmem:[%s378 + $0x90] sm:%s370] %v391
              %v393 = vld [vmem:[%s377 + $0xa8] sm:%s370]
              %394 = vst [vmem:[%s378 + $0xa8] sm:%s370] %v393
              %v395 = vld [vmem:[%s377 + $0xc0] sm:%s370]
              %396 = vst [vmem:[%s378 + $0xc0] sm:%s370] %v395
              %v397 = vld [vmem:[%s377 + $0xd8] sm:%s370]
              %398 = vst [vmem:[%s378 + $0xd8] sm:%s370] %v397
              %v399 = vld [vmem:[%s377 + $0xf0] sm:%s370]
              %400 = vst [vmem:[%s378 + $0xf0] sm:%s370] %v399
              %v401 = vld [vmem:[%s377 + $0x108] sm:%s370]
              %402 = vst [vmem:[%s378 + $0x108] sm:%s370] %v401
              %v403 = vld [vmem:[%s377 + $0x120] sm:%s370]
              %404 = vst [vmem:[%s378 + $0x120] sm:%s370] %v403
              %v405 = vld [vmem:[%s377 + $0x138] sm:%s370]
              %406 = vst [vmem:[%s378 + $0x138] sm:%s370] %v405
              %v407 = vld [vmem:[%s377 + $0x150] sm:%s370]
              %408 = vst [vmem:[%s378 + $0x150] sm:%s370] %v407
              %v409 = vld [vmem:[%s377 + $0x168] sm:%s370]
              %410 = vst [vmem:[%s378 + $0x168] sm:%s370] %v409
              %v411 = vld [vmem:[%s377 + $0x180] sm:%s370]
              %412 = vst [vmem:[%s378 + $0x180] sm:%s370] %v411
              %v413 = vld [vmem:[%s377 + $0x198] sm:%s370]
              %414 = vst [vmem:[%s378 + $0x198] sm:%s370] %v413
            $region86: #{tpu_custom_call.1} parent=80 // loop_footer
              %s376 = sadd.s32 1, %s372
            $region87: #{tpu_custom_call.1} parent=80 // loop_footer_branch
              %371 = sbr.rel target = $region83
            $region88: #{tpu_custom_call.1} parent=80 // loop_exit
              _
          $region81: #{tpu_custom_call.1} parent=72 // pred_fallthru
            _
          // Predicated region
          $region107: #{tpu_custom_call.1} parent=72 // pred_check
            _
          $region108: #{tpu_custom_call.1} parent=72 // pred_check_branch
            %552 = sbr.rel (0) target = $region110
          $region109: #{tpu_custom_call.1} parent=72 // pred_region
            %553 = vsyncadd %s361, 5184
          $region110: #{tpu_custom_call.1} parent=72 // pred_fallthru
            _
        $region73: #{tpu_custom_call.1} parent=27 // pred_fallthru
          _
        %s554 = smul.u32 %s149, 432
        %s555 = scalar_lea.vmem [#allocation2], %s554
        %s556 = scalar_lea.sflag [#allocation3], %s149
        %s557 = smul.u32 18, 18
        %s558 = smul.u32 %s557, 1
        %s559 = sshll.u32 %s558, 4
        %560 = dma.done %s556, %s559
        %v561 = vld [vmem:[%s555] sm:$0xff]
        %v562 = vld [vmem:[%s555 + $0x8] sm:$0xff]
        %v563 = vld [vmem:[%s555 + $0x18] sm:$0xff]
        %v564 = vld [vmem:[%s555 + $0x20] sm:$0xff]
        %v565 = vld [vmem:[%s555 + $0x30] sm:$0xff]
        %v566 = vld [vmem:[%s555 + $0x38] sm:$0xff]
        %v567 = vld [vmem:[%s555 + $0x48] sm:$0xff]
        %v568 = vld [vmem:[%s555 + $0x50] sm:$0xff]
        %v569 = vld [vmem:[%s555 + $0x60] sm:$0xff]
        %v570 = vld [vmem:[%s555 + $0x68] sm:$0xff]
        %v571 = vld [vmem:[%s555 + $0x78] sm:$0xff]
        %v572 = vld [vmem:[%s555 + $0x80] sm:$0xff]
        %v573 = vld [vmem:[%s555 + $0x90] sm:$0xff]
        %v574 = vld [vmem:[%s555 + $0x98] sm:$0xff]
        %v575 = vld [vmem:[%s555 + $0xa8] sm:$0xff]
        %v576 = vld [vmem:[%s555 + $0xb0] sm:$0xff]
        %v577 = vld [vmem:[%s555 + $0xc0] sm:$0xff]
        %v578 = vld [vmem:[%s555 + $0xc8] sm:$0xff]
        %v579 = vld [vmem:[%s555 + $0xd8] sm:$0xff]
        %v580 = vld [vmem:[%s555 + $0xe0] sm:$0xff]
        %v581 = vld [vmem:[%s555 + $0xf0] sm:$0xff]
        %v582 = vld [vmem:[%s555 + $0xf8] sm:$0xff]
        %v583 = vld [vmem:[%s555 + $0x108] sm:$0xff]
        %v584 = vld [vmem:[%s555 + $0x110] sm:$0xff]
        %v585 = vld [vmem:[%s555 + $0x120] sm:$0xff]
        %v586 = vld [vmem:[%s555 + $0x128] sm:$0xff]
        %v587 = vld [vmem:[%s555 + $0x138] sm:$0xff]
        %v588 = vld [vmem:[%s555 + $0x140] sm:$0xff]
        %v589 = vld [vmem:[%s555 + $0x150] sm:$0xff]
        %v590 = vld [vmem:[%s555 + $0x158] sm:$0xff]
        %v591 = vld [vmem:[%s555 + $0x168] sm:$0xff]
        %v592 = vld [vmem:[%s555 + $0x170] sm:$0xff]
        %v593 = vld [vmem:[%s1] sm:$0x1]
        %v594 = vlaneseq
        %v595 = vshrl.u32 %v594, 7
        %v596 = vsub.s32 0, %v595
        %v597 = vrot.slane %v593, %v596
        %v598 = vmul.f32 %v561, %v597
        %v599 = vmul.f32 %v562, %v597
        %v600 = vmul.f32 %v563, %v597
        %v601 = vmul.f32 %v564, %v597
        %v602 = vmul.f32 %v565, %v597
        %v603 = vmul.f32 %v566, %v597
        %v604 = vmul.f32 %v567, %v597
        %v605 = vmul.f32 %v568, %v597
        %v606 = vmul.f32 %v569, %v597
        %v607 = vmul.f32 %v570, %v597
        %v608 = vmul.f32 %v571, %v597
        %v609 = vmul.f32 %v572, %v597
        %v610 = vmul.f32 %v573, %v597
        %v611 = vmul.f32 %v574, %v597
        %v612 = vmul.f32 %v575, %v597
        %v613 = vmul.f32 %v576, %v597
        %v614 = vmul.f32 %v577, %v597
        %v615 = vmul.f32 %v578, %v597
        %v616 = vmul.f32 %v579, %v597
        %v617 = vmul.f32 %v580, %v597
        %v618 = vmul.f32 %v581, %v597
        %v619 = vmul.f32 %v582, %v597
        %v620 = vmul.f32 %v583, %v597
        %v621 = vmul.f32 %v584, %v597
        %v622 = vmul.f32 %v585, %v597
        %v623 = vmul.f32 %v586, %v597
        %v624 = vmul.f32 %v587, %v597
        %v625 = vmul.f32 %v588, %v597
        %v626 = vmul.f32 %v589, %v597
        %v627 = vmul.f32 %v590, %v597
        %v628 = vmul.f32 %v591, %v597
        %v629 = vmul.f32 %v592, %v597
        %v630 = vld [vmem:[%s555 + $0x1] sm:$0xff]
        %v631 = vld [vmem:[%s555 + $0x9] sm:$0xff]
        %v632 = vld [vmem:[%s555 + $0x19] sm:$0xff]
        %v633 = vld [vmem:[%s555 + $0x21] sm:$0xff]
        %v634 = vld [vmem:[%s555 + $0x31] sm:$0xff]
        %v635 = vld [vmem:[%s555 + $0x39] sm:$0xff]
        %v636 = vld [vmem:[%s555 + $0x49] sm:$0xff]
        %v637 = vld [vmem:[%s555 + $0x51] sm:$0xff]
        %v638 = vld [vmem:[%s555 + $0x61] sm:$0xff]
        %v639 = vld [vmem:[%s555 + $0x69] sm:$0xff]
        %v640 = vld [vmem:[%s555 + $0x79] sm:$0xff]
        %v641 = vld [vmem:[%s555 + $0x81] sm:$0xff]
        %v642 = vld [vmem:[%s555 + $0x91] sm:$0xff]
        %v643 = vld [vmem:[%s555 + $0x99] sm:$0xff]
        %v644 = vld [vmem:[%s555 + $0xa9] sm:$0xff]
        %v645 = vld [vmem:[%s555 + $0xb1] sm:$0xff]
        %v646 = vld [vmem:[%s555 + $0xc1] sm:$0xff]
        %v647 = vld [vmem:[%s555 + $0xc9] sm:$0xff]
        %v648 = vld [vmem:[%s555 + $0xd9] sm:$0xff]
        %v649 = vld [vmem:[%s555 + $0xe1] sm:$0xff]
        %v650 = vld [vmem:[%s555 + $0xf1] sm:$0xff]
        %v651 = vld [vmem:[%s555 + $0xf9] sm:$0xff]
        %v652 = vld [vmem:[%s555 + $0x109] sm:$0xff]
        %v653 = vld [vmem:[%s555 + $0x111] sm:$0xff]
        %v654 = vld [vmem:[%s555 + $0x121] sm:$0xff]
        %v655 = vld [vmem:[%s555 + $0x129] sm:$0xff]
        %v656 = vld [vmem:[%s555 + $0x139] sm:$0xff]
        %v657 = vld [vmem:[%s555 + $0x141] sm:$0xff]
        %v658 = vld [vmem:[%s555 + $0x151] sm:$0xff]
        %v659 = vld [vmem:[%s555 + $0x159] sm:$0xff]
        %v660 = vld [vmem:[%s555 + $0x169] sm:$0xff]
        %v661 = vld [vmem:[%s555 + $0x171] sm:$0xff]
        %v662 = vld [vmem:[%s1 + $0x1] sm:$0x1]
        %v663 = vlaneseq
        %v664 = vshrl.u32 %v663, 7
        %v665 = vsub.s32 0, %v664
        %v666 = vrot.slane %v662, %v665
        %v667 = vmul.f32 %v630, %v666
        %v668 = vmul.f32 %v631, %v666
        %v669 = vmul.f32 %v632, %v666
        %v670 = vmul.f32 %v633, %v666
        %v671 = vmul.f32 %v634, %v666
        %v672 = vmul.f32 %v635, %v666
        %v673 = vmul.f32 %v636, %v666
        %v674 = vmul.f32 %v637, %v666
        %v675 = vmul.f32 %v638, %v666
        %v676 = vmul.f32 %v639, %v666
        %v677 = vmul.f32 %v640, %v666
        %v678 = vmul.f32 %v641, %v666
        %v679 = vmul.f32 %v642, %v666
        %v680 = vmul.f32 %v643, %v666
        %v681 = vmul.f32 %v644, %v666
        %v682 = vmul.f32 %v645, %v666
        %v683 = vmul.f32 %v646, %v666
        %v684 = vmul.f32 %v647, %v666
        %v685 = vmul.f32 %v648, %v666
        %v686 = vmul.f32 %v649, %v666
        %v687 = vmul.f32 %v650, %v666
        %v688 = vmul.f32 %v651, %v666
        %v689 = vmul.f32 %v652, %v666
        %v690 = vmul.f32 %v653, %v666
        %v691 = vmul.f32 %v654, %v666
        %v692 = vmul.f32 %v655, %v666
        %v693 = vmul.f32 %v656, %v666
        %v694 = vmul.f32 %v657, %v666
        %v695 = vmul.f32 %v658, %v666
        %v696 = vmul.f32 %v659, %v666
        %v697 = vmul.f32 %v660, %v666
        %v698 = vmul.f32 %v661, %v666
        %v699 = vadd.f32 %v598, %v667
        %v700 = vadd.f32 %v599, %v668
        %v701 = vadd.f32 %v600, %v669
        %v702 = vadd.f32 %v601, %v670
        %v703 = vadd.f32 %v602, %v671
        %v704 = vadd.f32 %v603, %v672
        %v705 = vadd.f32 %v604, %v673
        %v706 = vadd.f32 %v605, %v674
        %v707 = vadd.f32 %v606, %v675
        %v708 = vadd.f32 %v607, %v676
        %v709 = vadd.f32 %v608, %v677
        %v710 = vadd.f32 %v609, %v678
        %v711 = vadd.f32 %v610, %v679
        %v712 = vadd.f32 %v611, %v680
        %v713 = vadd.f32 %v612, %v681
        %v714 = vadd.f32 %v613, %v682
        %v715 = vadd.f32 %v614, %v683
        %v716 = vadd.f32 %v615, %v684
        %v717 = vadd.f32 %v616, %v685
        %v718 = vadd.f32 %v617, %v686
        %v719 = vadd.f32 %v618, %v687
        %v720 = vadd.f32 %v619, %v688
        %v721 = vadd.f32 %v620, %v689
        %v722 = vadd.f32 %v621, %v690
        %v723 = vadd.f32 %v622, %v691
        %v724 = vadd.f32 %v623, %v692
        %v725 = vadd.f32 %v624, %v693
        %v726 = vadd.f32 %v625, %v694
        %v727 = vadd.f32 %v626, %v695
        %v728 = vadd.f32 %v627, %v696
        %v729 = vadd.f32 %v628, %v697
        %v730 = vadd.f32 %v629, %v698
        %v731 = vld [vmem:[%s555 + $0x2] sm:$0xff]
        %v732 = vld [vmem:[%s555 + $0xa] sm:$0xff]
        %v733 = vld [vmem:[%s555 + $0x1a] sm:$0xff]
        %v734 = vld [vmem:[%s555 + $0x22] sm:$0xff]
        %v735 = vld [vmem:[%s555 + $0x32] sm:$0xff]
        %v736 = vld [vmem:[%s555 + $0x3a] sm:$0xff]
        %v737 = vld [vmem:[%s555 + $0x4a] sm:$0xff]
        %v738 = vld [vmem:[%s555 + $0x52] sm:$0xff]
        %v739 = vld [vmem:[%s555 + $0x62] sm:$0xff]
        %v740 = vld [vmem:[%s555 + $0x6a] sm:$0xff]
        %v741 = vld [vmem:[%s555 + $0x7a] sm:$0xff]
        %v742 = vld [vmem:[%s555 + $0x82] sm:$0xff]
        %v743 = vld [vmem:[%s555 + $0x92] sm:$0xff]
        %v744 = vld [vmem:[%s555 + $0x9a] sm:$0xff]
        %v745 = vld [vmem:[%s555 + $0xaa] sm:$0xff]
        %v746 = vld [vmem:[%s555 + $0xb2] sm:$0xff]
        %v747 = vld [vmem:[%s555 + $0xc2] sm:$0xff]
        %v748 = vld [vmem:[%s555 + $0xca] sm:$0xff]
        %v749 = vld [vmem:[%s555 + $0xda] sm:$0xff]
        %v750 = vld [vmem:[%s555 + $0xe2] sm:$0xff]
        %v751 = vld [vmem:[%s555 + $0xf2] sm:$0xff]
        %v752 = vld [vmem:[%s555 + $0xfa] sm:$0xff]
        %v753 = vld [vmem:[%s555 + $0x10a] sm:$0xff]
        %v754 = vld [vmem:[%s555 + $0x112] sm:$0xff]
        %v755 = vld [vmem:[%s555 + $0x122] sm:$0xff]
        %v756 = vld [vmem:[%s555 + $0x12a] sm:$0xff]
        %v757 = vld [vmem:[%s555 + $0x13a] sm:$0xff]
        %v758 = vld [vmem:[%s555 + $0x142] sm:$0xff]
        %v759 = vld [vmem:[%s555 + $0x152] sm:$0xff]
        %v760 = vld [vmem:[%s555 + $0x15a] sm:$0xff]
        %v761 = vld [vmem:[%s555 + $0x16a] sm:$0xff]
        %v762 = vld [vmem:[%s555 + $0x172] sm:$0xff]
        %v763 = vld [vmem:[%s1 + $0x2] sm:$0x1]
        %v764 = vlaneseq
        %v765 = vshrl.u32 %v764, 7
        %v766 = vsub.s32 0, %v765
        %v767 = vrot.slane %v763, %v766
        %v768 = vmul.f32 %v731, %v767
        %v769 = vmul.f32 %v732, %v767
        %v770 = vmul.f32 %v733, %v767
        %v771 = vmul.f32 %v734, %v767
        %v772 = vmul.f32 %v735, %v767
        %v773 = vmul.f32 %v736, %v767
        %v774 = vmul.f32 %v737, %v767
        %v775 = vmul.f32 %v738, %v767
        %v776 = vmul.f32 %v739, %v767
        %v777 = vmul.f32 %v740, %v767
        %v778 = vmul.f32 %v741, %v767
        %v779 = vmul.f32 %v742, %v767
        %v780 = vmul.f32 %v743, %v767
        %v781 = vmul.f32 %v744, %v767
        %v782 = vmul.f32 %v745, %v767
        %v783 = vmul.f32 %v746, %v767
        %v784 = vmul.f32 %v747, %v767
        %v785 = vmul.f32 %v748, %v767
        %v786 = vmul.f32 %v749, %v767
        %v787 = vmul.f32 %v750, %v767
        %v788 = vmul.f32 %v751, %v767
        %v789 = vmul.f32 %v752, %v767
        %v790 = vmul.f32 %v753, %v767
        %v791 = vmul.f32 %v754, %v767
        %v792 = vmul.f32 %v755, %v767
        %v793 = vmul.f32 %v756, %v767
        %v794 = vmul.f32 %v757, %v767
        %v795 = vmul.f32 %v758, %v767
        %v796 = vmul.f32 %v759, %v767
        %v797 = vmul.f32 %v760, %v767
        %v798 = vmul.f32 %v761, %v767
        %v799 = vmul.f32 %v762, %v767
        %v800 = vadd.f32 %v699, %v768
        %v801 = vadd.f32 %v700, %v769
        %v802 = vadd.f32 %v701, %v770
        %v803 = vadd.f32 %v702, %v771
        %v804 = vadd.f32 %v703, %v772
        %v805 = vadd.f32 %v704, %v773
        %v806 = vadd.f32 %v705, %v774
        %v807 = vadd.f32 %v706, %v775
        %v808 = vadd.f32 %v707, %v776
        %v809 = vadd.f32 %v708, %v777
        %v810 = vadd.f32 %v709, %v778
        %v811 = vadd.f32 %v710, %v779
        %v812 = vadd.f32 %v711, %v780
        %v813 = vadd.f32 %v712, %v781
        %v814 = vadd.f32 %v713, %v782
        %v815 = vadd.f32 %v714, %v783
        %v816 = vadd.f32 %v715, %v784
        %v817 = vadd.f32 %v716, %v785
        %v818 = vadd.f32 %v717, %v786
        %v819 = vadd.f32 %v718, %v787
        %v820 = vadd.f32 %v719, %v788
        %v821 = vadd.f32 %v720, %v789
        %v822 = vadd.f32 %v721, %v790
        %v823 = vadd.f32 %v722, %v791
        %v824 = vadd.f32 %v723, %v792
        %v825 = vadd.f32 %v724, %v793
        %v826 = vadd.f32 %v725, %v794
        %v827 = vadd.f32 %v726, %v795
        %v828 = vadd.f32 %v727, %v796
        %v829 = vadd.f32 %v728, %v797
        %v830 = vadd.f32 %v729, %v798
        %v831 = vadd.f32 %v730, %v799
        %s832 = scalar_lea.vmem %s555, 24 [#allocation2]
        %v833 = vld [vmem:[%s832] sm:$0xff]
        %v834 = vld [vmem:[%s832 + $0x8] sm:$0xff]
        %v835 = vld [vmem:[%s832 + $0x18] sm:$0xff]
        %v836 = vld [vmem:[%s832 + $0x20] sm:$0xff]
        %v837 = vld [vmem:[%s832 + $0x30] sm:$0xff]
        %v838 = vld [vmem:[%s832 + $0x38] sm:$0xff]
        %v839 = vld [vmem:[%s832 + $0x48] sm:$0xff]
        %v840 = vld [vmem:[%s832 + $0x50] sm:$0xff]
        %v841 = vld [vmem:[%s832 + $0x60] sm:$0xff]
        %v842 = vld [vmem:[%s832 + $0x68] sm:$0xff]
        %v843 = vld [vmem:[%s832 + $0x78] sm:$0xff]
        %v844 = vld [vmem:[%s832 + $0x80] sm:$0xff]
        %v845 = vld [vmem:[%s832 + $0x90] sm:$0xff]
        %v846 = vld [vmem:[%s832 + $0x98] sm:$0xff]
        %v847 = vld [vmem:[%s832 + $0xa8] sm:$0xff]
        %v848 = vld [vmem:[%s832 + $0xb0] sm:$0xff]
        %v849 = vld [vmem:[%s832 + $0xc0] sm:$0xff]
        %v850 = vld [vmem:[%s832 + $0xc8] sm:$0xff]
        %v851 = vld [vmem:[%s832 + $0xd8] sm:$0xff]
        %v852 = vld [vmem:[%s832 + $0xe0] sm:$0xff]
        %v853 = vld [vmem:[%s832 + $0xf0] sm:$0xff]
        %v854 = vld [vmem:[%s832 + $0xf8] sm:$0xff]
        %v855 = vld [vmem:[%s832 + $0x108] sm:$0xff]
        %v856 = vld [vmem:[%s832 + $0x110] sm:$0xff]
        %v857 = vld [vmem:[%s832 + $0x120] sm:$0xff]
        %v858 = vld [vmem:[%s832 + $0x128] sm:$0xff]
        %v859 = vld [vmem:[%s832 + $0x138] sm:$0xff]
        %v860 = vld [vmem:[%s832 + $0x140] sm:$0xff]
        %v861 = vld [vmem:[%s832 + $0x150] sm:$0xff]
        %v862 = vld [vmem:[%s832 + $0x158] sm:$0xff]
        %v863 = vld [vmem:[%s832 + $0x168] sm:$0xff]
        %v864 = vld [vmem:[%s832 + $0x170] sm:$0xff]
        %s865 = scalar_lea.vmem %s1, 4
        %v866 = vld [vmem:[%s865] sm:$0x1]
        %v867 = vlaneseq
        %v868 = vshrl.u32 %v867, 7
        %v869 = vsub.s32 0, %v868
        %v870 = vrot.slane %v866, %v869
        %v871 = vmul.f32 %v833, %v870
        %v872 = vmul.f32 %v834, %v870
        %v873 = vmul.f32 %v835, %v870
        %v874 = vmul.f32 %v836, %v870
        %v875 = vmul.f32 %v837, %v870
        %v876 = vmul.f32 %v838, %v870
        %v877 = vmul.f32 %v839, %v870
        %v878 = vmul.f32 %v840, %v870
        %v879 = vmul.f32 %v841, %v870
        %v880 = vmul.f32 %v842, %v870
        %v881 = vmul.f32 %v843, %v870
        %v882 = vmul.f32 %v844, %v870
        %v883 = vmul.f32 %v845, %v870
        %v884 = vmul.f32 %v846, %v870
        %v885 = vmul.f32 %v847, %v870
        %v886 = vmul.f32 %v848, %v870
        %v887 = vmul.f32 %v849, %v870
        %v888 = vmul.f32 %v850, %v870
        %v889 = vmul.f32 %v851, %v870
        %v890 = vmul.f32 %v852, %v870
        %v891 = vmul.f32 %v853, %v870
        %v892 = vmul.f32 %v854, %v870
        %v893 = vmul.f32 %v855, %v870
        %v894 = vmul.f32 %v856, %v870
        %v895 = vmul.f32 %v857, %v870
        %v896 = vmul.f32 %v858, %v870
        %v897 = vmul.f32 %v859, %v870
        %v898 = vmul.f32 %v860, %v870
        %v899 = vmul.f32 %v861, %v870
        %v900 = vmul.f32 %v862, %v870
        %v901 = vmul.f32 %v863, %v870
        %v902 = vmul.f32 %v864, %v870
        %v903 = vadd.f32 %v800, %v871
        %v904 = vadd.f32 %v801, %v872
        %v905 = vadd.f32 %v802, %v873
        %v906 = vadd.f32 %v803, %v874
        %v907 = vadd.f32 %v804, %v875
        %v908 = vadd.f32 %v805, %v876
        %v909 = vadd.f32 %v806, %v877
        %v910 = vadd.f32 %v807, %v878
        %v911 = vadd.f32 %v808, %v879
        %v912 = vadd.f32 %v809, %v880
        %v913 = vadd.f32 %v810, %v881
        %v914 = vadd.f32 %v811, %v882
        %v915 = vadd.f32 %v812, %v883
        %v916 = vadd.f32 %v813, %v884
        %v917 = vadd.f32 %v814, %v885
        %v918 = vadd.f32 %v815, %v886
        %v919 = vadd.f32 %v816, %v887
        %v920 = vadd.f32 %v817, %v888
        %v921 = vadd.f32 %v818, %v889
        %v922 = vadd.f32 %v819, %v890
        %v923 = vadd.f32 %v820, %v891
        %v924 = vadd.f32 %v821, %v892
        %v925 = vadd.f32 %v822, %v893
        %v926 = vadd.f32 %v823, %v894
        %v927 = vadd.f32 %v824, %v895
        %v928 = vadd.f32 %v825, %v896
        %v929 = vadd.f32 %v826, %v897
        %v930 = vadd.f32 %v827, %v898
        %v931 = vadd.f32 %v828, %v899
        %v932 = vadd.f32 %v829, %v900
        %v933 = vadd.f32 %v830, %v901
        %v934 = vadd.f32 %v831, %v902
        %v935 = vld [vmem:[%s832 + $0x1] sm:$0xff]
        %v936 = vld [vmem:[%s832 + $0x9] sm:$0xff]
        %v937 = vld [vmem:[%s832 + $0x19] sm:$0xff]
        %v938 = vld [vmem:[%s832 + $0x21] sm:$0xff]
        %v939 = vld [vmem:[%s832 + $0x31] sm:$0xff]
        %v940 = vld [vmem:[%s832 + $0x39] sm:$0xff]
        %v941 = vld [vmem:[%s832 + $0x49] sm:$0xff]
        %v942 = vld [vmem:[%s832 + $0x51] sm:$0xff]
        %v943 = vld [vmem:[%s832 + $0x61] sm:$0xff]
        %v944 = vld [vmem:[%s832 + $0x69] sm:$0xff]
        %v945 = vld [vmem:[%s832 + $0x79] sm:$0xff]
        %v946 = vld [vmem:[%s832 + $0x81] sm:$0xff]
        %v947 = vld [vmem:[%s832 + $0x91] sm:$0xff]
        %v948 = vld [vmem:[%s832 + $0x99] sm:$0xff]
        %v949 = vld [vmem:[%s832 + $0xa9] sm:$0xff]
        %v950 = vld [vmem:[%s832 + $0xb1] sm:$0xff]
        %v951 = vld [vmem:[%s832 + $0xc1] sm:$0xff]
        %v952 = vld [vmem:[%s832 + $0xc9] sm:$0xff]
        %v953 = vld [vmem:[%s832 + $0xd9] sm:$0xff]
        %v954 = vld [vmem:[%s832 + $0xe1] sm:$0xff]
        %v955 = vld [vmem:[%s832 + $0xf1] sm:$0xff]
        %v956 = vld [vmem:[%s832 + $0xf9] sm:$0xff]
        %v957 = vld [vmem:[%s832 + $0x109] sm:$0xff]
        %v958 = vld [vmem:[%s832 + $0x111] sm:$0xff]
        %v959 = vld [vmem:[%s832 + $0x121] sm:$0xff]
        %v960 = vld [vmem:[%s832 + $0x129] sm:$0xff]
        %v961 = vld [vmem:[%s832 + $0x139] sm:$0xff]
        %v962 = vld [vmem:[%s832 + $0x141] sm:$0xff]
        %v963 = vld [vmem:[%s832 + $0x151] sm:$0xff]
        %v964 = vld [vmem:[%s832 + $0x159] sm:$0xff]
        %v965 = vld [vmem:[%s832 + $0x169] sm:$0xff]
        %v966 = vld [vmem:[%s832 + $0x171] sm:$0xff]
        %v967 = vld [vmem:[%s865 + $0x1] sm:$0x1]
        %v968 = vlaneseq
        %v969 = vshrl.u32 %v968, 7
        %v970 = vsub.s32 0, %v969
        %v971 = vrot.slane %v967, %v970
        %v972 = vmul.f32 %v935, %v971
        %v973 = vmul.f32 %v936, %v971
        %v974 = vmul.f32 %v937, %v971
        %v975 = vmul.f32 %v938, %v971
        %v976 = vmul.f32 %v939, %v971
        %v977 = vmul.f32 %v940, %v971
        %v978 = vmul.f32 %v941, %v971
        %v979 = vmul.f32 %v942, %v971
        %v980 = vmul.f32 %v943, %v971
        %v981 = vmul.f32 %v944, %v971
        %v982 = vmul.f32 %v945, %v971
        %v983 = vmul.f32 %v946, %v971
        %v984 = vmul.f32 %v947, %v971
        %v985 = vmul.f32 %v948, %v971
        %v986 = vmul.f32 %v949, %v971
        %v987 = vmul.f32 %v950, %v971
        %v988 = vmul.f32 %v951, %v971
        %v989 = vmul.f32 %v952, %v971
        %v990 = vmul.f32 %v953, %v971
        %v991 = vmul.f32 %v954, %v971
        %v992 = vmul.f32 %v955, %v971
        %v993 = vmul.f32 %v956, %v971
        %v994 = vmul.f32 %v957, %v971
        %v995 = vmul.f32 %v958, %v971
        %v996 = vmul.f32 %v959, %v971
        %v997 = vmul.f32 %v960, %v971
        %v998 = vmul.f32 %v961, %v971
        %v999 = vmul.f32 %v962, %v971
        %v1000 = vmul.f32 %v963, %v971
        %v1001 = vmul.f32 %v964, %v971
        %v1002 = vmul.f32 %v965, %v971
        %v1003 = vmul.f32 %v966, %v971
        %v1004 = vadd.f32 %v903, %v972
        %v1005 = vadd.f32 %v904, %v973
        %v1006 = vadd.f32 %v905, %v974
        %v1007 = vadd.f32 %v906, %v975
        %v1008 = vadd.f32 %v907, %v976
        %v1009 = vadd.f32 %v908, %v977
        %v1010 = vadd.f32 %v909, %v978
        %v1011 = vadd.f32 %v910, %v979
        %v1012 = vadd.f32 %v911, %v980
        %v1013 = vadd.f32 %v912, %v981
        %v1014 = vadd.f32 %v913, %v982
        %v1015 = vadd.f32 %v914, %v983
        %v1016 = vadd.f32 %v915, %v984
        %v1017 = vadd.f32 %v916, %v985
        %v1018 = vadd.f32 %v917, %v986
        %v1019 = vadd.f32 %v918, %v987
        %v1020 = vadd.f32 %v919, %v988
        %v1021 = vadd.f32 %v920, %v989
        %v1022 = vadd.f32 %v921, %v990
        %v1023 = vadd.f32 %v922, %v991
        %v1024 = vadd.f32 %v923, %v992
        %v1025 = vadd.f32 %v924, %v993
        %v1026 = vadd.f32 %v925, %v994
        %v1027 = vadd.f32 %v926, %v995
        %v1028 = vadd.f32 %v927, %v996
        %v1029 = vadd.f32 %v928, %v997
        %v1030 = vadd.f32 %v929, %v998
        %v1031 = vadd.f32 %v930, %v999
        %v1032 = vadd.f32 %v931, %v1000
        %v1033 = vadd.f32 %v932, %v1001
        %v1034 = vadd.f32 %v933, %v1002
        %v1035 = vadd.f32 %v934, %v1003
        %v1036 = vld [vmem:[%s832 + $0x2] sm:$0xff]
        %v1037 = vld [vmem:[%s832 + $0xa] sm:$0xff]
        %v1038 = vld [vmem:[%s832 + $0x1a] sm:$0xff]
        %v1039 = vld [vmem:[%s832 + $0x22] sm:$0xff]
        %v1040 = vld [vmem:[%s832 + $0x32] sm:$0xff]
        %v1041 = vld [vmem:[%s832 + $0x3a] sm:$0xff]
        %v1042 = vld [vmem:[%s832 + $0x4a] sm:$0xff]
        %v1043 = vld [vmem:[%s832 + $0x52] sm:$0xff]
        %v1044 = vld [vmem:[%s832 + $0x62] sm:$0xff]
        %v1045 = vld [vmem:[%s832 + $0x6a] sm:$0xff]
        %v1046 = vld [vmem:[%s832 + $0x7a] sm:$0xff]
        %v1047 = vld [vmem:[%s832 + $0x82] sm:$0xff]
        %v1048 = vld [vmem:[%s832 + $0x92] sm:$0xff]
        %v1049 = vld [vmem:[%s832 + $0x9a] sm:$0xff]
        %v1050 = vld [vmem:[%s832 + $0xaa] sm:$0xff]
        %v1051 = vld [vmem:[%s832 + $0xb2] sm:$0xff]
        %v1052 = vld [vmem:[%s832 + $0xc2] sm:$0xff]
        %v1053 = vld [vmem:[%s832 + $0xca] sm:$0xff]
        %v1054 = vld [vmem:[%s832 + $0xda] sm:$0xff]
        %v1055 = vld [vmem:[%s832 + $0xe2] sm:$0xff]
        %v1056 = vld [vmem:[%s832 + $0xf2] sm:$0xff]
        %v1057 = vld [vmem:[%s832 + $0xfa] sm:$0xff]
        %v1058 = vld [vmem:[%s832 + $0x10a] sm:$0xff]
        %v1059 = vld [vmem:[%s832 + $0x112] sm:$0xff]
        %v1060 = vld [vmem:[%s832 + $0x122] sm:$0xff]
        %v1061 = vld [vmem:[%s832 + $0x12a] sm:$0xff]
        %v1062 = vld [vmem:[%s832 + $0x13a] sm:$0xff]
        %v1063 = vld [vmem:[%s832 + $0x142] sm:$0xff]
        %v1064 = vld [vmem:[%s832 + $0x152] sm:$0xff]
        %v1065 = vld [vmem:[%s832 + $0x15a] sm:$0xff]
        %v1066 = vld [vmem:[%s832 + $0x16a] sm:$0xff]
        %v1067 = vld [vmem:[%s832 + $0x172] sm:$0xff]
        %v1068 = vld [vmem:[%s865 + $0x2] sm:$0x1]
        %v1069 = vlaneseq
        %v1070 = vshrl.u32 %v1069, 7
        %v1071 = vsub.s32 0, %v1070
        %v1072 = vrot.slane %v1068, %v1071
        %v1073 = vmul.f32 %v1036, %v1072
        %v1074 = vmul.f32 %v1037, %v1072
        %v1075 = vmul.f32 %v1038, %v1072
        %v1076 = vmul.f32 %v1039, %v1072
        %v1077 = vmul.f32 %v1040, %v1072
        %v1078 = vmul.f32 %v1041, %v1072
        %v1079 = vmul.f32 %v1042, %v1072
        %v1080 = vmul.f32 %v1043, %v1072
        %v1081 = vmul.f32 %v1044, %v1072
        %v1082 = vmul.f32 %v1045, %v1072
        %v1083 = vmul.f32 %v1046, %v1072
        %v1084 = vmul.f32 %v1047, %v1072
        %v1085 = vmul.f32 %v1048, %v1072
        %v1086 = vmul.f32 %v1049, %v1072
        %v1087 = vmul.f32 %v1050, %v1072
        %v1088 = vmul.f32 %v1051, %v1072
        %v1089 = vmul.f32 %v1052, %v1072
        %v1090 = vmul.f32 %v1053, %v1072
        %v1091 = vmul.f32 %v1054, %v1072
        %v1092 = vmul.f32 %v1055, %v1072
        %v1093 = vmul.f32 %v1056, %v1072
        %v1094 = vmul.f32 %v1057, %v1072
        %v1095 = vmul.f32 %v1058, %v1072
        %v1096 = vmul.f32 %v1059, %v1072
        %v1097 = vmul.f32 %v1060, %v1072
        %v1098 = vmul.f32 %v1061, %v1072
        %v1099 = vmul.f32 %v1062, %v1072
        %v1100 = vmul.f32 %v1063, %v1072
        %v1101 = vmul.f32 %v1064, %v1072
        %v1102 = vmul.f32 %v1065, %v1072
        %v1103 = vmul.f32 %v1066, %v1072
        %v1104 = vmul.f32 %v1067, %v1072
        %v1105 = vadd.f32 %v1004, %v1073
        %v1106 = vadd.f32 %v1005, %v1074
        %v1107 = vadd.f32 %v1006, %v1075
        %v1108 = vadd.f32 %v1007, %v1076
        %v1109 = vadd.f32 %v1008, %v1077
        %v1110 = vadd.f32 %v1009, %v1078
        %v1111 = vadd.f32 %v1010, %v1079
        %v1112 = vadd.f32 %v1011, %v1080
        %v1113 = vadd.f32 %v1012, %v1081
        %v1114 = vadd.f32 %v1013, %v1082
        %v1115 = vadd.f32 %v1014, %v1083
        %v1116 = vadd.f32 %v1015, %v1084
        %v1117 = vadd.f32 %v1016, %v1085
        %v1118 = vadd.f32 %v1017, %v1086
        %v1119 = vadd.f32 %v1018, %v1087
        %v1120 = vadd.f32 %v1019, %v1088
        %v1121 = vadd.f32 %v1020, %v1089
        %v1122 = vadd.f32 %v1021, %v1090
        %v1123 = vadd.f32 %v1022, %v1091
        %v1124 = vadd.f32 %v1023, %v1092
        %v1125 = vadd.f32 %v1024, %v1093
        %v1126 = vadd.f32 %v1025, %v1094
        %v1127 = vadd.f32 %v1026, %v1095
        %v1128 = vadd.f32 %v1027, %v1096
        %v1129 = vadd.f32 %v1028, %v1097
        %v1130 = vadd.f32 %v1029, %v1098
        %v1131 = vadd.f32 %v1030, %v1099
        %v1132 = vadd.f32 %v1031, %v1100
        %v1133 = vadd.f32 %v1032, %v1101
        %v1134 = vadd.f32 %v1033, %v1102
        %v1135 = vadd.f32 %v1034, %v1103
        %v1136 = vadd.f32 %v1035, %v1104
        %s1137 = scalar_lea.vmem %s555, 48 [#allocation2]
        %v1138 = vld [vmem:[%s1137] sm:$0xff]
        %v1139 = vld [vmem:[%s1137 + $0x8] sm:$0xff]
        %v1140 = vld [vmem:[%s1137 + $0x18] sm:$0xff]
        %v1141 = vld [vmem:[%s1137 + $0x20] sm:$0xff]
        %v1142 = vld [vmem:[%s1137 + $0x30] sm:$0xff]
        %v1143 = vld [vmem:[%s1137 + $0x38] sm:$0xff]
        %v1144 = vld [vmem:[%s1137 + $0x48] sm:$0xff]
        %v1145 = vld [vmem:[%s1137 + $0x50] sm:$0xff]
        %v1146 = vld [vmem:[%s1137 + $0x60] sm:$0xff]
        %v1147 = vld [vmem:[%s1137 + $0x68] sm:$0xff]
        %v1148 = vld [vmem:[%s1137 + $0x78] sm:$0xff]
        %v1149 = vld [vmem:[%s1137 + $0x80] sm:$0xff]
        %v1150 = vld [vmem:[%s1137 + $0x90] sm:$0xff]
        %v1151 = vld [vmem:[%s1137 + $0x98] sm:$0xff]
        %v1152 = vld [vmem:[%s1137 + $0xa8] sm:$0xff]
        %v1153 = vld [vmem:[%s1137 + $0xb0] sm:$0xff]
        %v1154 = vld [vmem:[%s1137 + $0xc0] sm:$0xff]
        %v1155 = vld [vmem:[%s1137 + $0xc8] sm:$0xff]
        %v1156 = vld [vmem:[%s1137 + $0xd8] sm:$0xff]
        %v1157 = vld [vmem:[%s1137 + $0xe0] sm:$0xff]
        %v1158 = vld [vmem:[%s1137 + $0xf0] sm:$0xff]
        %v1159 = vld [vmem:[%s1137 + $0xf8] sm:$0xff]
        %v1160 = vld [vmem:[%s1137 + $0x108] sm:$0xff]
        %v1161 = vld [vmem:[%s1137 + $0x110] sm:$0xff]
        %v1162 = vld [vmem:[%s1137 + $0x120] sm:$0xff]
        %v1163 = vld [vmem:[%s1137 + $0x128] sm:$0xff]
        %v1164 = vld [vmem:[%s1137 + $0x138] sm:$0xff]
        %v1165 = vld [vmem:[%s1137 + $0x140] sm:$0xff]
        %v1166 = vld [vmem:[%s1137 + $0x150] sm:$0xff]
        %v1167 = vld [vmem:[%s1137 + $0x158] sm:$0xff]
        %v1168 = vld [vmem:[%s1137 + $0x168] sm:$0xff]
        %v1169 = vld [vmem:[%s1137 + $0x170] sm:$0xff]
        %s1170 = scalar_lea.vmem %s1, 8
        %v1171 = vld [vmem:[%s1170] sm:$0x1]
        %v1172 = vlaneseq
        %v1173 = vshrl.u32 %v1172, 7
        %v1174 = vsub.s32 0, %v1173
        %v1175 = vrot.slane %v1171, %v1174
        %v1176 = vmul.f32 %v1138, %v1175
        %v1177 = vmul.f32 %v1139, %v1175
        %v1178 = vmul.f32 %v1140, %v1175
        %v1179 = vmul.f32 %v1141, %v1175
        %v1180 = vmul.f32 %v1142, %v1175
        %v1181 = vmul.f32 %v1143, %v1175
        %v1182 = vmul.f32 %v1144, %v1175
        %v1183 = vmul.f32 %v1145, %v1175
        %v1184 = vmul.f32 %v1146, %v1175
        %v1185 = vmul.f32 %v1147, %v1175
        %v1186 = vmul.f32 %v1148, %v1175
        %v1187 = vmul.f32 %v1149, %v1175
        %v1188 = vmul.f32 %v1150, %v1175
        %v1189 = vmul.f32 %v1151, %v1175
        %v1190 = vmul.f32 %v1152, %v1175
        %v1191 = vmul.f32 %v1153, %v1175
        %v1192 = vmul.f32 %v1154, %v1175
        %v1193 = vmul.f32 %v1155, %v1175
        %v1194 = vmul.f32 %v1156, %v1175
        %v1195 = vmul.f32 %v1157, %v1175
        %v1196 = vmul.f32 %v1158, %v1175
        %v1197 = vmul.f32 %v1159, %v1175
        %v1198 = vmul.f32 %v1160, %v1175
        %v1199 = vmul.f32 %v1161, %v1175
        %v1200 = vmul.f32 %v1162, %v1175
        %v1201 = vmul.f32 %v1163, %v1175
        %v1202 = vmul.f32 %v1164, %v1175
        %v1203 = vmul.f32 %v1165, %v1175
        %v1204 = vmul.f32 %v1166, %v1175
        %v1205 = vmul.f32 %v1167, %v1175
        %v1206 = vmul.f32 %v1168, %v1175
        %v1207 = vmul.f32 %v1169, %v1175
        %v1208 = vadd.f32 %v1105, %v1176
        %v1209 = vadd.f32 %v1106, %v1177
        %v1210 = vadd.f32 %v1107, %v1178
        %v1211 = vadd.f32 %v1108, %v1179
        %v1212 = vadd.f32 %v1109, %v1180
        %v1213 = vadd.f32 %v1110, %v1181
        %v1214 = vadd.f32 %v1111, %v1182
        %v1215 = vadd.f32 %v1112, %v1183
        %v1216 = vadd.f32 %v1113, %v1184
        %v1217 = vadd.f32 %v1114, %v1185
        %v1218 = vadd.f32 %v1115, %v1186
        %v1219 = vadd.f32 %v1116, %v1187
        %v1220 = vadd.f32 %v1117, %v1188
        %v1221 = vadd.f32 %v1118, %v1189
        %v1222 = vadd.f32 %v1119, %v1190
        %v1223 = vadd.f32 %v1120, %v1191
        %v1224 = vadd.f32 %v1121, %v1192
        %v1225 = vadd.f32 %v1122, %v1193
        %v1226 = vadd.f32 %v1123, %v1194
        %v1227 = vadd.f32 %v1124, %v1195
        %v1228 = vadd.f32 %v1125, %v1196
        %v1229 = vadd.f32 %v1126, %v1197
        %v1230 = vadd.f32 %v1127, %v1198
        %v1231 = vadd.f32 %v1128, %v1199
        %v1232 = vadd.f32 %v1129, %v1200
        %v1233 = vadd.f32 %v1130, %v1201
        %v1234 = vadd.f32 %v1131, %v1202
        %v1235 = vadd.f32 %v1132, %v1203
        %v1236 = vadd.f32 %v1133, %v1204
        %v1237 = vadd.f32 %v1134, %v1205
        %v1238 = vadd.f32 %v1135, %v1206
        %v1239 = vadd.f32 %v1136, %v1207
        %v1240 = vld [vmem:[%s1137 + $0x1] sm:$0xff]
        %v1241 = vld [vmem:[%s1137 + $0x9] sm:$0xff]
        %v1242 = vld [vmem:[%s1137 + $0x19] sm:$0xff]
        %v1243 = vld [vmem:[%s1137 + $0x21] sm:$0xff]
        %v1244 = vld [vmem:[%s1137 + $0x31] sm:$0xff]
        %v1245 = vld [vmem:[%s1137 + $0x39] sm:$0xff]
        %v1246 = vld [vmem:[%s1137 + $0x49] sm:$0xff]
        %v1247 = vld [vmem:[%s1137 + $0x51] sm:$0xff]
        %v1248 = vld [vmem:[%s1137 + $0x61] sm:$0xff]
        %v1249 = vld [vmem:[%s1137 + $0x69] sm:$0xff]
        %v1250 = vld [vmem:[%s1137 + $0x79] sm:$0xff]
        %v1251 = vld [vmem:[%s1137 + $0x81] sm:$0xff]
        %v1252 = vld [vmem:[%s1137 + $0x91] sm:$0xff]
        %v1253 = vld [vmem:[%s1137 + $0x99] sm:$0xff]
        %v1254 = vld [vmem:[%s1137 + $0xa9] sm:$0xff]
        %v1255 = vld [vmem:[%s1137 + $0xb1] sm:$0xff]
        %v1256 = vld [vmem:[%s1137 + $0xc1] sm:$0xff]
        %v1257 = vld [vmem:[%s1137 + $0xc9] sm:$0xff]
        %v1258 = vld [vmem:[%s1137 + $0xd9] sm:$0xff]
        %v1259 = vld [vmem:[%s1137 + $0xe1] sm:$0xff]
        %v1260 = vld [vmem:[%s1137 + $0xf1] sm:$0xff]
        %v1261 = vld [vmem:[%s1137 + $0xf9] sm:$0xff]
        %v1262 = vld [vmem:[%s1137 + $0x109] sm:$0xff]
        %v1263 = vld [vmem:[%s1137 + $0x111] sm:$0xff]
        %v1264 = vld [vmem:[%s1137 + $0x121] sm:$0xff]
        %v1265 = vld [vmem:[%s1137 + $0x129] sm:$0xff]
        %v1266 = vld [vmem:[%s1137 + $0x139] sm:$0xff]
        %v1267 = vld [vmem:[%s1137 + $0x141] sm:$0xff]
        %v1268 = vld [vmem:[%s1137 + $0x151] sm:$0xff]
        %v1269 = vld [vmem:[%s1137 + $0x159] sm:$0xff]
        %v1270 = vld [vmem:[%s1137 + $0x169] sm:$0xff]
        %v1271 = vld [vmem:[%s1137 + $0x171] sm:$0xff]
        %v1272 = vld [vmem:[%s1170 + $0x1] sm:$0x1]
        %v1273 = vlaneseq
        %v1274 = vshrl.u32 %v1273, 7
        %v1275 = vsub.s32 0, %v1274
        %v1276 = vrot.slane %v1272, %v1275
        %v1277 = vmul.f32 %v1240, %v1276
        %v1278 = vmul.f32 %v1241, %v1276
        %v1279 = vmul.f32 %v1242, %v1276
        %v1280 = vmul.f32 %v1243, %v1276
        %v1281 = vmul.f32 %v1244, %v1276
        %v1282 = vmul.f32 %v1245, %v1276
        %v1283 = vmul.f32 %v1246, %v1276
        %v1284 = vmul.f32 %v1247, %v1276
        %v1285 = vmul.f32 %v1248, %v1276
        %v1286 = vmul.f32 %v1249, %v1276
        %v1287 = vmul.f32 %v1250, %v1276
        %v1288 = vmul.f32 %v1251, %v1276
        %v1289 = vmul.f32 %v1252, %v1276
        %v1290 = vmul.f32 %v1253, %v1276
        %v1291 = vmul.f32 %v1254, %v1276
        %v1292 = vmul.f32 %v1255, %v1276
        %v1293 = vmul.f32 %v1256, %v1276
        %v1294 = vmul.f32 %v1257, %v1276
        %v1295 = vmul.f32 %v1258, %v1276
        %v1296 = vmul.f32 %v1259, %v1276
        %v1297 = vmul.f32 %v1260, %v1276
        %v1298 = vmul.f32 %v1261, %v1276
        %v1299 = vmul.f32 %v1262, %v1276
        %v1300 = vmul.f32 %v1263, %v1276
        %v1301 = vmul.f32 %v1264, %v1276
        %v1302 = vmul.f32 %v1265, %v1276
        %v1303 = vmul.f32 %v1266, %v1276
        %v1304 = vmul.f32 %v1267, %v1276
        %v1305 = vmul.f32 %v1268, %v1276
        %v1306 = vmul.f32 %v1269, %v1276
        %v1307 = vmul.f32 %v1270, %v1276
        %v1308 = vmul.f32 %v1271, %v1276
        %v1309 = vadd.f32 %v1208, %v1277
        %v1310 = vadd.f32 %v1209, %v1278
        %v1311 = vadd.f32 %v1210, %v1279
        %v1312 = vadd.f32 %v1211, %v1280
        %v1313 = vadd.f32 %v1212, %v1281
        %v1314 = vadd.f32 %v1213, %v1282
        %v1315 = vadd.f32 %v1214, %v1283
        %v1316 = vadd.f32 %v1215, %v1284
        %v1317 = vadd.f32 %v1216, %v1285
        %v1318 = vadd.f32 %v1217, %v1286
        %v1319 = vadd.f32 %v1218, %v1287
        %v1320 = vadd.f32 %v1219, %v1288
        %v1321 = vadd.f32 %v1220, %v1289
        %v1322 = vadd.f32 %v1221, %v1290
        %v1323 = vadd.f32 %v1222, %v1291
        %v1324 = vadd.f32 %v1223, %v1292
        %v1325 = vadd.f32 %v1224, %v1293
        %v1326 = vadd.f32 %v1225, %v1294
        %v1327 = vadd.f32 %v1226, %v1295
        %v1328 = vadd.f32 %v1227, %v1296
        %v1329 = vadd.f32 %v1228, %v1297
        %v1330 = vadd.f32 %v1229, %v1298
        %v1331 = vadd.f32 %v1230, %v1299
        %v1332 = vadd.f32 %v1231, %v1300
        %v1333 = vadd.f32 %v1232, %v1301
        %v1334 = vadd.f32 %v1233, %v1302
        %v1335 = vadd.f32 %v1234, %v1303
        %v1336 = vadd.f32 %v1235, %v1304
        %v1337 = vadd.f32 %v1236, %v1305
        %v1338 = vadd.f32 %v1237, %v1306
        %v1339 = vadd.f32 %v1238, %v1307
        %v1340 = vadd.f32 %v1239, %v1308
        %v1341 = vld [vmem:[%s1137 + $0x2] sm:$0xff]
        %v1342 = vld [vmem:[%s1137 + $0xa] sm:$0xff]
        %v1343 = vld [vmem:[%s1137 + $0x1a] sm:$0xff]
        %v1344 = vld [vmem:[%s1137 + $0x22] sm:$0xff]
        %v1345 = vld [vmem:[%s1137 + $0x32] sm:$0xff]
        %v1346 = vld [vmem:[%s1137 + $0x3a] sm:$0xff]
        %v1347 = vld [vmem:[%s1137 + $0x4a] sm:$0xff]
        %v1348 = vld [vmem:[%s1137 + $0x52] sm:$0xff]
        %v1349 = vld [vmem:[%s1137 + $0x62] sm:$0xff]
        %v1350 = vld [vmem:[%s1137 + $0x6a] sm:$0xff]
        %v1351 = vld [vmem:[%s1137 + $0x7a] sm:$0xff]
        %v1352 = vld [vmem:[%s1137 + $0x82] sm:$0xff]
        %v1353 = vld [vmem:[%s1137 + $0x92] sm:$0xff]
        %v1354 = vld [vmem:[%s1137 + $0x9a] sm:$0xff]
        %v1355 = vld [vmem:[%s1137 + $0xaa] sm:$0xff]
        %v1356 = vld [vmem:[%s1137 + $0xb2] sm:$0xff]
        %v1357 = vld [vmem:[%s1137 + $0xc2] sm:$0xff]
        %v1358 = vld [vmem:[%s1137 + $0xca] sm:$0xff]
        %v1359 = vld [vmem:[%s1137 + $0xda] sm:$0xff]
        %v1360 = vld [vmem:[%s1137 + $0xe2] sm:$0xff]
        %v1361 = vld [vmem:[%s1137 + $0xf2] sm:$0xff]
        %v1362 = vld [vmem:[%s1137 + $0xfa] sm:$0xff]
        %v1363 = vld [vmem:[%s1137 + $0x10a] sm:$0xff]
        %v1364 = vld [vmem:[%s1137 + $0x112] sm:$0xff]
        %v1365 = vld [vmem:[%s1137 + $0x122] sm:$0xff]
        %v1366 = vld [vmem:[%s1137 + $0x12a] sm:$0xff]
        %v1367 = vld [vmem:[%s1137 + $0x13a] sm:$0xff]
        %v1368 = vld [vmem:[%s1137 + $0x142] sm:$0xff]
        %v1369 = vld [vmem:[%s1137 + $0x152] sm:$0xff]
        %v1370 = vld [vmem:[%s1137 + $0x15a] sm:$0xff]
        %v1371 = vld [vmem:[%s1137 + $0x16a] sm:$0xff]
        %v1372 = vld [vmem:[%s1137 + $0x172] sm:$0xff]
        %v1373 = vld [vmem:[%s1170 + $0x2] sm:$0x1]
        %v1374 = vlaneseq
        %v1375 = vshrl.u32 %v1374, 7
        %v1376 = vsub.s32 0, %v1375
        %v1377 = vrot.slane %v1373, %v1376
        %v1378 = vmul.f32 %v1341, %v1377
        %v1379 = vmul.f32 %v1342, %v1377
        %v1380 = vmul.f32 %v1343, %v1377
        %v1381 = vmul.f32 %v1344, %v1377
        %v1382 = vmul.f32 %v1345, %v1377
        %v1383 = vmul.f32 %v1346, %v1377
        %v1384 = vmul.f32 %v1347, %v1377
        %v1385 = vmul.f32 %v1348, %v1377
        %v1386 = vmul.f32 %v1349, %v1377
        %v1387 = vmul.f32 %v1350, %v1377
        %v1388 = vmul.f32 %v1351, %v1377
        %v1389 = vmul.f32 %v1352, %v1377
        %v1390 = vmul.f32 %v1353, %v1377
        %v1391 = vmul.f32 %v1354, %v1377
        %v1392 = vmul.f32 %v1355, %v1377
        %v1393 = vmul.f32 %v1356, %v1377
        %v1394 = vmul.f32 %v1357, %v1377
        %v1395 = vmul.f32 %v1358, %v1377
        %v1396 = vmul.f32 %v1359, %v1377
        %v1397 = vmul.f32 %v1360, %v1377
        %v1398 = vmul.f32 %v1361, %v1377
        %v1399 = vmul.f32 %v1362, %v1377
        %v1400 = vmul.f32 %v1363, %v1377
        %v1401 = vmul.f32 %v1364, %v1377
        %v1402 = vmul.f32 %v1365, %v1377
        %v1403 = vmul.f32 %v1366, %v1377
        %v1404 = vmul.f32 %v1367, %v1377
        %v1405 = vmul.f32 %v1368, %v1377
        %v1406 = vmul.f32 %v1369, %v1377
        %v1407 = vmul.f32 %v1370, %v1377
        %v1408 = vmul.f32 %v1371, %v1377
        %v1409 = vmul.f32 %v1372, %v1377
        %v1410 = vadd.f32 %v1309, %v1378
        %v1411 = vadd.f32 %v1310, %v1379
        %v1412 = vadd.f32 %v1311, %v1380
        %v1413 = vadd.f32 %v1312, %v1381
        %v1414 = vadd.f32 %v1313, %v1382
        %v1415 = vadd.f32 %v1314, %v1383
        %v1416 = vadd.f32 %v1315, %v1384
        %v1417 = vadd.f32 %v1316, %v1385
        %v1418 = vadd.f32 %v1317, %v1386
        %v1419 = vadd.f32 %v1318, %v1387
        %v1420 = vadd.f32 %v1319, %v1388
        %v1421 = vadd.f32 %v1320, %v1389
        %v1422 = vadd.f32 %v1321, %v1390
        %v1423 = vadd.f32 %v1322, %v1391
        %v1424 = vadd.f32 %v1323, %v1392
        %v1425 = vadd.f32 %v1324, %v1393
        %v1426 = vadd.f32 %v1325, %v1394
        %v1427 = vadd.f32 %v1326, %v1395
        %v1428 = vadd.f32 %v1327, %v1396
        %v1429 = vadd.f32 %v1328, %v1397
        %v1430 = vadd.f32 %v1329, %v1398
        %v1431 = vadd.f32 %v1330, %v1399
        %v1432 = vadd.f32 %v1331, %v1400
        %v1433 = vadd.f32 %v1332, %v1401
        %v1434 = vadd.f32 %v1333, %v1402
        %v1435 = vadd.f32 %v1334, %v1403
        %v1436 = vadd.f32 %v1335, %v1404
        %v1437 = vadd.f32 %v1336, %v1405
        %v1438 = vadd.f32 %v1337, %v1406
        %v1439 = vadd.f32 %v1338, %v1407
        %v1440 = vadd.f32 %v1339, %v1408
        %v1441 = vadd.f32 %v1340, %v1409
        %v1442 = vld [vmem:[%s2] sm:$0xff]
        %v1443 = vld [vmem:[%s2 + $0x8] sm:$0xff]
        %v1444 = vld [vmem:[%s2 + $0x10] sm:$0xff]
        %v1445 = vld [vmem:[%s2 + $0x18] sm:$0xff]
        %v1446 = vld [vmem:[%s2 + $0x20] sm:$0xff]
        %v1447 = vld [vmem:[%s2 + $0x28] sm:$0xff]
        %v1448 = vld [vmem:[%s2 + $0x30] sm:$0xff]
        %v1449 = vld [vmem:[%s2 + $0x38] sm:$0xff]
        %v1450 = vld [vmem:[%s2 + $0x40] sm:$0xff]
        %v1451 = vld [vmem:[%s2 + $0x48] sm:$0xff]
        %v1452 = vld [vmem:[%s2 + $0x50] sm:$0xff]
        %v1453 = vld [vmem:[%s2 + $0x58] sm:$0xff]
        %v1454 = vld [vmem:[%s2 + $0x60] sm:$0xff]
        %v1455 = vld [vmem:[%s2 + $0x68] sm:$0xff]
        %v1456 = vld [vmem:[%s2 + $0x70] sm:$0xff]
        %v1457 = vld [vmem:[%s2 + $0x78] sm:$0xff]
        %1458 = vmatprep.subr.mxu0 0.0
        %1459 = vmatpush1.msra.mxu0 %v1442
        %1460 = vmatprep.subr.mxu0 0.0
        %1461 = vmatpush1.msra.mxu0 %v1443
        %1462 = vmatprep.subr.mxu0 0.0
        %1463 = vmatpush1.msra.mxu0 %v1444
        %1464 = vmatprep.subr.mxu0 0.0
        %1465 = vmatpush1.msra.mxu0 %v1445
        %1466 = vmatprep.subr.mxu0 0.0
        %1467 = vmatpush1.msra.mxu0 %v1446
        %1468 = vmatprep.subr.mxu0 0.0
        %1469 = vmatpush1.msra.mxu0 %v1447
        %1470 = vmatprep.subr.mxu0 0.0
        %1471 = vmatpush1.msra.mxu0 %v1448
        %1472 = vmatprep.subr.mxu0 0.0
        %1473 = vmatpush1.msra.mxu0 %v1449
        %1474 = vmatprep.subr.mxu0 0.0
        %1475 = vmatpush1.msra.mxu0 %v1450
        %1476 = vmatprep.subr.mxu0 0.0
        %1477 = vmatpush1.msra.mxu0 %v1451
        %1478 = vmatprep.subr.mxu0 0.0
        %1479 = vmatpush1.msra.mxu0 %v1452
        %1480 = vmatprep.subr.mxu0 0.0
        %1481 = vmatpush1.msra.mxu0 %v1453
        %1482 = vmatprep.subr.mxu0 0.0
        %1483 = vmatpush1.msra.mxu0 %v1454
        %1484 = vmatprep.subr.mxu0 0.0
        %1485 = vmatpush1.msra.mxu0 %v1455
        %1486 = vmatprep.subr.mxu0 0.0
        %1487 = vmatpush1.msra.mxu0 %v1456
        %1488 = vmatprep.subr.mxu0 0.0
        %1489 = vmatpush1.msra.mxu0 %v1457
        %1490 = vmatprep.subr.mxu0 0.0
        %1491 = vmatpush1.msra.mxu0 0.0
        %1492 = vmatprep.subr.mxu0 0.0
        %1493 = vmatpush1.msra.mxu0 0.0
        %1494 = vmatprep.subr.mxu0 0.0
        %1495 = vmatpush1.msra.mxu0 0.0
        %1496 = vmatprep.subr.mxu0 0.0
        %1497 = vmatpush1.msra.mxu0 0.0
        %1498 = vmatprep.subr.mxu0 0.0
        %1499 = vmatpush1.msra.mxu0 0.0
        %1500 = vmatprep.subr.mxu0 0.0
        %1501 = vmatpush1.msra.mxu0 0.0
        %1502 = vmatprep.subr.mxu0 0.0
        %1503 = vmatpush1.msra.mxu0 0.0
        %1504 = vmatprep.subr.mxu0 0.0
        %1505 = vmatpush1.msra.mxu0 0.0
        %1506 = vmatprep.subr.mxu0 0.0
        %1507 = vmatpush1.msra.mxu0 0.0
        %1508 = vmatprep.subr.mxu0 0.0
        %1509 = vmatpush1.msra.mxu0 0.0
        %1510 = vmatprep.subr.mxu0 0.0
        %1511 = vmatpush1.msra.mxu0 0.0
        %1512 = vmatprep.subr.mxu0 0.0
        %1513 = vmatpush1.msra.mxu0 0.0
        %1514 = vmatprep.subr.mxu0 0.0
        %1515 = vmatpush1.msra.mxu0 0.0
        %1516 = vmatprep.subr.mxu0 0.0
        %1517 = vmatpush1.msra.mxu0 0.0
        %1518 = vmatprep.subr.mxu0 0.0
        %1519 = vmatpush1.msra.mxu0 0.0
        %1520 = vmatprep.subr.mxu0 0.0
        %1521 = vmatpush1.msra.mxu0 0.0
        %1522 = vmatprep.mubr.f32.mxu0 0.0
        %1523 = vmatmul.mubr.f32.gmra.mrb[0].mxu0 %v1410
        %v1524 = vpop.f32.mrb[0].mxu0
        %v1525 = vadd.f32 0.0, %v1524
        %v1526 = vpop.f32.mrb[0].mxu0
        %1527 = vmatprep.mubr.f32.mxu0 0.0
        %1528 = vmatmul.mubr.f32.gmra.mrb[0].mxu0 %v1411
        %v1529 = vpop.f32.mrb[0].mxu0
        %v1530 = vadd.f32 0.0, %v1529
        %v1531 = vpop.f32.mrb[0].mxu0
        %1532 = vmatprep.mubr.f32.mxu0 0.0
        %1533 = vmatmul.mubr.f32.gmra.mrb[0].mxu0 %v1412
        %v1534 = vpop.f32.mrb[0].mxu0
        %v1535 = vadd.f32 0.0, %v1534
        %v1536 = vpop.f32.mrb[0].mxu0
        %1537 = vmatprep.mubr.f32.mxu0 0.0
        %1538 = vmatmul.mubr.f32.gmra.mrb[0].mxu0 %v1413
        %v1539 = vpop.f32.mrb[0].mxu0
        %v1540 = vadd.f32 0.0, %v1539
        %v1541 = vpop.f32.mrb[0].mxu0
        %1542 = vmatprep.mubr.f32.mxu0 0.0
        %1543 = vmatmul.mubr.f32.gmra.mrb[0].mxu0 %v1414
        %v1544 = vpop.f32.mrb[0].mxu0
        %v1545 = vadd.f32 0.0, %v1544
        %v1546 = vpop.f32.mrb[0].mxu0
        %1547 = vmatprep.mubr.f32.mxu0 0.0
        %1548 = vmatmul.mubr.f32.gmra.mrb[0].mxu0 %v1415
        %v1549 = vpop.f32.mrb[0].mxu0
        %v1550 = vadd.f32 0.0, %v1549
        %v1551 = vpop.f32.mrb[0].mxu0
        %1552 = vmatprep.mubr.f32.mxu0 0.0
        %1553 = vmatmul.mubr.f32.gmra.mrb[0].mxu0 %v1416
        %v1554 = vpop.f32.mrb[0].mxu0
        %v1555 = vadd.f32 0.0, %v1554
        %v1556 = vpop.f32.mrb[0].mxu0
        %1557 = vmatprep.mubr.f32.mxu0 0.0
        %1558 = vmatmul.mubr.f32.gmra.mrb[0].mxu0 %v1417
        %v1559 = vpop.f32.mrb[0].mxu0
        %v1560 = vadd.f32 0.0, %v1559
        %v1561 = vpop.f32.mrb[0].mxu0
        %1562 = vmatprep.mubr.f32.mxu0 0.0
        %1563 = vmatmul.mubr.f32.gmra.mrb[0].mxu0 %v1418
        %v1564 = vpop.f32.mrb[0].mxu0
        %v1565 = vadd.f32 0.0, %v1564
        %v1566 = vpop.f32.mrb[0].mxu0
        %1567 = vmatprep.mubr.f32.mxu0 0.0
        %1568 = vmatmul.mubr.f32.gmra.mrb[0].mxu0 %v1419
        %v1569 = vpop.f32.mrb[0].mxu0
        %v1570 = vadd.f32 0.0, %v1569
        %v1571 = vpop.f32.mrb[0].mxu0
        %1572 = vmatprep.mubr.f32.mxu0 0.0
        %1573 = vmatmul.mubr.f32.gmra.mrb[0].mxu0 %v1420
        %v1574 = vpop.f32.mrb[0].mxu0
        %v1575 = vadd.f32 0.0, %v1574
        %v1576 = vpop.f32.mrb[0].mxu0
        %1577 = vmatprep.mubr.f32.mxu0 0.0
        %1578 = vmatmul.mubr.f32.gmra.mrb[0].mxu0 %v1421
        %v1579 = vpop.f32.mrb[0].mxu0
        %v1580 = vadd.f32 0.0, %v1579
        %v1581 = vpop.f32.mrb[0].mxu0
        %1582 = vmatprep.mubr.f32.mxu0 0.0
        %1583 = vmatmul.mubr.f32.gmra.mrb[0].mxu0 %v1422
        %v1584 = vpop.f32.mrb[0].mxu0
        %v1585 = vadd.f32 0.0, %v1584
        %v1586 = vpop.f32.mrb[0].mxu0
        %1587 = vmatprep.mubr.f32.mxu0 0.0
        %1588 = vmatmul.mubr.f32.gmra.mrb[0].mxu0 %v1423
        %v1589 = vpop.f32.mrb[0].mxu0
        %v1590 = vadd.f32 0.0, %v1589
        %v1591 = vpop.f32.mrb[0].mxu0
        %1592 = vmatprep.mubr.f32.mxu0 0.0
        %1593 = vmatmul.mubr.f32.gmra.mrb[0].mxu0 %v1424
        %v1594 = vpop.f32.mrb[0].mxu0
        %v1595 = vadd.f32 0.0, %v1594
        %v1596 = vpop.f32.mrb[0].mxu0
        %1597 = vmatprep.mubr.f32.mxu0 0.0
        %1598 = vmatmul.mubr.f32.gmra.mrb[0].mxu0 %v1425
        %v1599 = vpop.f32.mrb[0].mxu0
        %v1600 = vadd.f32 0.0, %v1599
        %v1601 = vpop.f32.mrb[0].mxu0
        %1602 = vmatprep.mubr.f32.mxu0 0.0
        %1603 = vmatmul.mubr.f32.gmra.mrb[0].mxu0 %v1426
        %v1604 = vpop.f32.mrb[0].mxu0
        %v1605 = vadd.f32 0.0, %v1604
        %v1606 = vpop.f32.mrb[0].mxu0
        %1607 = vmatprep.mubr.f32.mxu0 0.0
        %1608 = vmatmul.mubr.f32.gmra.mrb[0].mxu0 %v1427
        %v1609 = vpop.f32.mrb[0].mxu0
        %v1610 = vadd.f32 0.0, %v1609
        %v1611 = vpop.f32.mrb[0].mxu0
        %1612 = vmatprep.mubr.f32.mxu0 0.0
        %1613 = vmatmul.mubr.f32.gmra.mrb[0].mxu0 %v1428
        %v1614 = vpop.f32.mrb[0].mxu0
        %v1615 = vadd.f32 0.0, %v1614
        %v1616 = vpop.f32.mrb[0].mxu0
        %1617 = vmatprep.mubr.f32.mxu0 0.0
        %1618 = vmatmul.mubr.f32.gmra.mrb[0].mxu0 %v1429
        %v1619 = vpop.f32.mrb[0].mxu0
        %v1620 = vadd.f32 0.0, %v1619
        %v1621 = vpop.f32.mrb[0].mxu0
        %1622 = vmatprep.mubr.f32.mxu0 0.0
        %1623 = vmatmul.mubr.f32.gmra.mrb[0].mxu0 %v1430
        %v1624 = vpop.f32.mrb[0].mxu0
        %v1625 = vadd.f32 0.0, %v1624
        %v1626 = vpop.f32.mrb[0].mxu0
        %1627 = vmatprep.mubr.f32.mxu0 0.0
        %1628 = vmatmul.mubr.f32.gmra.mrb[0].mxu0 %v1431
        %v1629 = vpop.f32.mrb[0].mxu0
        %v1630 = vadd.f32 0.0, %v1629
        %v1631 = vpop.f32.mrb[0].mxu0
        %1632 = vmatprep.mubr.f32.mxu0 0.0
        %1633 = vmatmul.mubr.f32.gmra.mrb[0].mxu0 %v1432
        %v1634 = vpop.f32.mrb[0].mxu0
        %v1635 = vadd.f32 0.0, %v1634
        %v1636 = vpop.f32.mrb[0].mxu0
        %1637 = vmatprep.mubr.f32.mxu0 0.0
        %1638 = vmatmul.mubr.f32.gmra.mrb[0].mxu0 %v1433
        %v1639 = vpop.f32.mrb[0].mxu0
        %v1640 = vadd.f32 0.0, %v1639
        %v1641 = vpop.f32.mrb[0].mxu0
        %1642 = vmatprep.mubr.f32.mxu0 0.0
        %1643 = vmatmul.mubr.f32.gmra.mrb[0].mxu0 %v1434
        %v1644 = vpop.f32.mrb[0].mxu0
        %v1645 = vadd.f32 0.0, %v1644
        %v1646 = vpop.f32.mrb[0].mxu0
        %1647 = vmatprep.mubr.f32.mxu0 0.0
        %1648 = vmatmul.mubr.f32.gmra.mrb[0].mxu0 %v1435
        %v1649 = vpop.f32.mrb[0].mxu0
        %v1650 = vadd.f32 0.0, %v1649
        %v1651 = vpop.f32.mrb[0].mxu0
        %1652 = vmatprep.mubr.f32.mxu0 0.0
        %1653 = vmatmul.mubr.f32.gmra.mrb[0].mxu0 %v1436
        %v1654 = vpop.f32.mrb[0].mxu0
        %v1655 = vadd.f32 0.0, %v1654
        %v1656 = vpop.f32.mrb[0].mxu0
        %1657 = vmatprep.mubr.f32.mxu0 0.0
        %1658 = vmatmul.mubr.f32.gmra.mrb[0].mxu0 %v1437
        %v1659 = vpop.f32.mrb[0].mxu0
        %v1660 = vadd.f32 0.0, %v1659
        %v1661 = vpop.f32.mrb[0].mxu0
        %1662 = vmatprep.mubr.f32.mxu0 0.0
        %1663 = vmatmul.mubr.f32.gmra.mrb[0].mxu0 %v1438
        %v1664 = vpop.f32.mrb[0].mxu0
        %v1665 = vadd.f32 0.0, %v1664
        %v1666 = vpop.f32.mrb[0].mxu0
        %1667 = vmatprep.mubr.f32.mxu0 0.0
        %1668 = vmatmul.mubr.f32.gmra.mrb[0].mxu0 %v1439
        %v1669 = vpop.f32.mrb[0].mxu0
        %v1670 = vadd.f32 0.0, %v1669
        %v1671 = vpop.f32.mrb[0].mxu0
        %1672 = vmatprep.mubr.f32.mxu0 0.0
        %1673 = vmatmul.mubr.f32.gmra.mrb[0].mxu0 %v1440
        %v1674 = vpop.f32.mrb[0].mxu0
        %v1675 = vadd.f32 0.0, %v1674
        %v1676 = vpop.f32.mrb[0].mxu0
        %1677 = vmatprep.mubr.f32.mxu0 0.0
        %1678 = vmatmul.mubr.f32.gmra.mrb[0].mxu0 %v1441
        %v1679 = vpop.f32.mrb[0].mxu0
        %v1680 = vadd.f32 0.0, %v1679
        %v1681 = vpop.f32.mrb[0].mxu0
        %1682 = vdwg.mxu0
        %1683 = vst [vmem:[%s136] sm:$0xff] %v1525
        %1684 = vst [vmem:[%s136 + $0x8] sm:$0xff] %v1530
        %1685 = vst [vmem:[%s136 + $0x10] sm:$0xff] %v1535
        %1686 = vst [vmem:[%s136 + $0x18] sm:$0xff] %v1540
        %1687 = vst [vmem:[%s136 + $0x20] sm:$0xff] %v1545
        %1688 = vst [vmem:[%s136 + $0x28] sm:$0xff] %v1550
        %1689 = vst [vmem:[%s136 + $0x30] sm:$0xff] %v1555
        %1690 = vst [vmem:[%s136 + $0x38] sm:$0xff] %v1560
        %1691 = vst [vmem:[%s136 + $0x40] sm:$0xff] %v1565
        %1692 = vst [vmem:[%s136 + $0x48] sm:$0xff] %v1570
        %1693 = vst [vmem:[%s136 + $0x50] sm:$0xff] %v1575
        %1694 = vst [vmem:[%s136 + $0x58] sm:$0xff] %v1580
        %1695 = vst [vmem:[%s136 + $0x60] sm:$0xff] %v1585
        %1696 = vst [vmem:[%s136 + $0x68] sm:$0xff] %v1590
        %1697 = vst [vmem:[%s136 + $0x70] sm:$0xff] %v1595
        %1698 = vst [vmem:[%s136 + $0x78] sm:$0xff] %v1600
        %1699 = vst [vmem:[%s136 + $0x80] sm:$0xff] %v1605
        %1700 = vst [vmem:[%s136 + $0x88] sm:$0xff] %v1610
        %1701 = vst [vmem:[%s136 + $0x90] sm:$0xff] %v1615
        %1702 = vst [vmem:[%s136 + $0x98] sm:$0xff] %v1620
        %1703 = vst [vmem:[%s136 + $0xa0] sm:$0xff] %v1625
        %1704 = vst [vmem:[%s136 + $0xa8] sm:$0xff] %v1630
        %1705 = vst [vmem:[%s136 + $0xb0] sm:$0xff] %v1635
        %1706 = vst [vmem:[%s136 + $0xb8] sm:$0xff] %v1640
        %1707 = vst [vmem:[%s136 + $0xc0] sm:$0xff] %v1645
        %1708 = vst [vmem:[%s136 + $0xc8] sm:$0xff] %v1650
        %1709 = vst [vmem:[%s136 + $0xd0] sm:$0xff] %v1655
        %1710 = vst [vmem:[%s136 + $0xd8] sm:$0xff] %v1660
        %1711 = vst [vmem:[%s136 + $0xe0] sm:$0xff] %v1665
        %1712 = vst [vmem:[%s136 + $0xe8] sm:$0xff] %v1670
        %1713 = vst [vmem:[%s136 + $0xf0] sm:$0xff] %v1675
        %1714 = vst [vmem:[%s136 + $0xf8] sm:$0xff] %v1680
        %s1715 = sand.u32 %s81, 1
        %s1716 = scalar_lea.sflag [#allocation5], %s1715
        %s1717 = sand.u32 %s81, 1
        %s1718 = smul.addr %s1717, 256
        %s1719 = scalar_lea.vmem [#allocation4], %s1718
        // Predicated region
        $region111: #{tpu_custom_call.1} parent=27 // pred_check
          %p1720 = pneg %p91
        $region112: #{tpu_custom_call.1} parent=27 // pred_check_branch
          %1722 = sbr.rel (%p1720) target = $region114
        $region113: #{tpu_custom_call.1} parent=27 // pred_region
          %s1723 = smul.u32 16, %s22
          %s1725 = ssub.s32 4096, 4096
          %1726 = vsyncadd %s1716, %s1725
          %s1727 = smul.addr %s1723, 2
          %s1728 = smul.addr %s21, 32
          %s1729 = sadd.s32 %s1727, %s1728
          %s1730 = smul.addr %s1729, 128
          %s1731 = scalar_lea.hbm %s3, %s1730
          %s1732 = sshll.u32 %s1719, 4
          %s1733 = int_to_ptr.vmem [resolvable:$true] %s1732
          %1738 = dma.vmem_to_hbm [thread:$0]  %s1733, 4096, %s1731, %s1716, 128, 128, 8
        $region114: #{tpu_custom_call.1} parent=27 // pred_fallthru
          _
      $region28: #{tpu_custom_call.1} parent=5 // pred_fallthru
        _
      %p1739 = scmp.le.s32.totalorder 2, %s12
      // Predicated region
      $region115: #{tpu_custom_call.1} parent=5 // pred_check
        %p1740 = pneg %p1739
      $region116: #{tpu_custom_call.1} parent=5 // pred_check_branch
        %1742 = sbr.rel (%p1740) target = $region118
      $region117: #{tpu_custom_call.1} parent=5 // pred_region
        %s1743 = ssub.s32 %s12, 2
        // Predicated region
        $region119: #{tpu_custom_call.1} parent=117 // pred_check
          %p1744 = pneg %p97
        $region120: #{tpu_custom_call.1} parent=117 // pred_check_branch
          %1746 = sbr.rel (%p1744) target = $region122
        $region121: #{tpu_custom_call.1} parent=117 // pred_region
          %s1747 = sand.u32 %s82, 1
          %s1748 = scalar_lea.sflag [#allocation5], %s1747
          %s1749 = sand.u32 %s82, 1
          %s1750 = smul.addr %s1749, 256
          %s1751 = scalar_lea.vmem [#allocation4], %s1750
          %1752 = dma.done %s1748, 4096
        $region122: #{tpu_custom_call.1} parent=117 // pred_fallthru
          _
      $region118: #{tpu_custom_call.1} parent=5 // pred_fallthru
        _
    $region6: #{tpu_custom_call.1} parent=1 // loop_footer
      %s16 = sadd.s32 1, %s12
    $region7: #{tpu_custom_call.1} parent=1 // loop_footer_branch
      %11 = sbr.rel target = $region3
    $region8: #{tpu_custom_call.1} parent=1 // loop_exit
      _
    %1753 = vsyncpa [#allocation5], 1
    %s1754 = scalar_lea.sflag [#allocation5], 1
    %1755 = vsyncpa %s1754, 1
  %1756 = vsyncmov [#allocation3]
  %s1757 = vpop.sfrf %1756
  %p1758 = scmp.eq.s32.totalorder %s1757, 0
  %p1759 = pneg %p1758
  %1761 = shalt.err (%p1759)
  %s1762 = scalar_lea.sflag [#allocation3], 1
  %1763 = vsyncmov %s1762
  %s1764 = vpop.sfrf %1763
  %p1765 = scmp.eq.s32.totalorder %s1764, 0
  %p1766 = pneg %p1765
  %1768 = shalt.err (%p1766)

</llo_original>
